<compile_context>
chip_gen: v7x
topology: tpu7x:2x2x1
jax: 0.10.0
libtpu: 0.0.40
codegen_flags: <defaults>
</compile_context>

<pallas_src>
import functools

import numpy as np
import jax
import jax.numpy as jnp
from jax.experimental import pallas as pl
from jax.experimental.pallas import tpu as pltpu


def _round_up(x, m):
    return ((x + m - 1) // m) * m


def _make_kernel(layer_dims, *, batch, seg_len, kernel, stride, activation,
                 cin_pad, neg_slope=0.01):
    """Fused BN + LeakyReLU + Conv1d stack.

    layer_dims: per-layer (c_in, c_out).
    Ref layout seen by the kernel:
      refs[0]                      x      (B, C0, L0)   NCL, consumed directly
      refs[1+4*l .. 1+4*l+3]       layer l params:
                                   wcat  (C_out, k*cin_pad)  taps flattened on sublanes
                                   bias  (C_out, 1)
                                   scale (C_in, 1), shift (C_in, 1)   (inference BN)
      refs[1+4*n]                  sel    (B*L0, B*L_out)   0/1 output gather matrix
      refs[2+4*n]                  out    (B, C_out_last, L_out_last)  NCL
      refs[3+4*n .. +n-1]          buf_l  (C_in_l, B*L0) f32 VMEM  dense activations
      refs[3+5*n]                  imcol  (k*cin_pad, B*L0) f32 VMEM
    """
    n = len(layer_dims)
    total = batch * seg_len
    k = kernel

    def kern(*refs):
        x_ref = refs[0]
        p = refs[1:1 + 4 * n]
        sel_ref = refs[1 + 4 * n]
        o_ref = refs[2 + 4 * n]
        bufs = refs[3 + 4 * n: 3 + 4 * n + n]
        imcol = refs[3 + 4 * n + n]

        # NaN-safety: scratch VMEM is uninitialized; the channel-padded im2col
        # rows must be exactly zero (0 * w_pad == 0, NaN * 0 == NaN).
        imcol[...] = jnp.zeros(imcol.shape, imcol.dtype)

        # ---- Layer-0 BatchNorm (inference), applied once at input load. ----
        s0 = p[2][...]            # (C0, 1)
        t0 = p[3][...]
        xv = x_ref[...]           # (B, C0, L0) — NCL consumed directly
        for b in range(batch):    # batch segments folded onto the lane axis
            bufs[0][:, b * seg_len:(b + 1) * seg_len] = xv[b] * s0 + t0

        # ---- Conv layers ('a trous': dense dilated convs, stride folded out). ----
        for l in range(n):
            c_in, _ = layer_dims[l]
            d = stride ** l                       # dilation at layer l
            wcat = p[4 * l][...]                  # (C_out, k*cin_pad), loaded once
            bias = p[4 * l + 1][...]              # (C_out, 1)
            v = bufs[l][...]                      # (C_in, total)

            # Sublane im2col: tap t = contiguous lane-shifted slab written at
            # sublane block t (8-aligned thanks to channel padding).
            for t in range(k):
                imcol[t * cin_pad:t * cin_pad + c_in, 0:total - t * d] = v[:, t * d:]

            # One MXU dot per layer for the whole batch.
            acc = jnp.dot(wcat, imcol[...],
                          preferred_element_type=jnp.float32,
                          precision=jax.lax.Precision.HIGHEST)
            acc = acc + bias                      # (C_out, total)

            if l + 1 < n:
                # Next layer's BN (+ LeakyReLU), fused into this epilogue.
                y = acc * p[4 * (l + 1) + 2][...] + p[4 * (l + 1) + 3][...]
                if activation:
                    y = jnp.where(y >= 0.0, y, neg_slope * y)
                bufs[l + 1][...] = y              # full-width store (lane-dense)
            else:
                # Pick the true strided output positions with one gather matmul
                # and write the NCL output directly.
                out = jnp.dot(acc, sel_ref[...],
                              preferred_element_type=jnp.float32,
                              precision=jax.lax.Precision.HIGHEST)
                l_out = out.shape[1] // batch
                out = out.astype(o_ref.dtype)
                for b in range(batch):
                    o_ref[b, :, :] = out[:, b * l_out:(b + 1) * l_out]

    return kern


def layered_cnn_tree_forward(x_ncl, params, *, kernel, stride, activation=True):
    """Fused Pallas forward. x_ncl: (B, C, L) like PyTorch; returns (B, C_out, L_out)."""
    b, c0, l0 = x_ncl.shape
    n = len(params)

    # Per-layer (c_in, c_out) and final true output length.
    dims = []
    l_true = l0
    for prm in params:
        c_out, c_in, _ = prm["w_oik"].shape
        l_true = (l_true - kernel) // stride + 1
        dims.append((c_in, c_out))
    l_out_f = l_true
    c_out_f = dims[-1][1]
    assert l_out_f >= 1

    cin_pad = _round_up(max(ci for ci, _ in dims), 8)
    total = b * l0

    # 0/1 gather matrix selecting the true (strided) output positions from the
    # dense 'a trous' result: column b*l_out+j selects dense lane b*l0 + j*stride**n.
    sel_np = np.zeros((total, b * l_out_f), np.float32)
    step = stride ** n
    for bb in range(b):
        for j in range(l_out_f):
            sel_np[bb * l0 + j * step, bb * l_out_f + j] = 1.0
    sel = jnp.asarray(sel_np)

    kern = _make_kernel(dims, batch=b, seg_len=l0, kernel=kernel, stride=stride,
                        activation=activation, cin_pad=cin_pad)

    inputs = [x_ncl]
    in_specs = [pl.BlockSpec((b, c0, l0), lambda i: (0, 0, 0))]

    def add(arr):
        inputs.append(arr)
        shape = tuple(arr.shape)
        nd = len(shape)
        in_specs.append(pl.BlockSpec(shape, (lambda i: (0,) * nd)))

    for li, prm in enumerate(params):
        c_in, c_out = dims[li]
        # (C_out, C_in, k) -> (C_out, k, cin_pad) -> (C_out, k*cin_pad), zero-padded channels.
        wkc = jnp.transpose(prm["w_oik"], (0, 2, 1))
        wkc = jnp.pad(wkc, ((0, 0), (0, 0), (0, cin_pad - c_in)))
        add(wkc.reshape(c_out, kernel * cin_pad))
        add(prm["bias"].reshape(c_out, 1))
        add(prm["scale"].reshape(c_in, 1))
        add(prm["shift"].reshape(c_in, 1))
    add(sel)

    scratch = [pltpu.VMEM((c_in, total), jnp.float32) for c_in, _ in dims]
    scratch.append(pltpu.VMEM((kernel * cin_pad, total), jnp.float32))

    return pl.pallas_call(
        kern,
        out_shape=jax.ShapeDtypeStruct((b, c_out_f, l_out_f), x_ncl.dtype),
        grid_spec=pltpu.PrefetchScalarGridSpec(
            num_scalar_prefetch=0,
            grid=(1,),                                   # single fused invocation
            in_specs=in_specs,
            out_specs=pl.BlockSpec((b, c_out_f, l_out_f), lambda i: (0, 0, 0)),
            scratch_shapes=scratch,
        ),
        compiler_params=pltpu.CompilerParams(dimension_semantics=("arbitrary",)),
    )(*inputs)


def init_params(key, layer_count, channel_list, kernel):
    """Deterministic synthetic parameters matching the PyTorch module's shapes."""
    eps = 1e-5
    params = []
    for i in range(layer_count):
        c_in = channel_list[0] if i == 0 else channel_list[1]
        c_out = channel_list[2] if i == layer_count - 1 else channel_list[1]
        key, kw, kb, kg, kbe = jax.random.split(key, 5)
        w_oik = jax.random.normal(kw, (c_out, c_in, kernel), jnp.float32) * 0.1
        bias = jax.random.normal(kb, (c_out,), jnp.float32) * 0.1
        gamma = 1.0 + 0.1 * jax.random.normal(kg, (c_in,), jnp.float32)
        beta = 0.1 * jax.random.normal(kbe, (c_in,), jnp.float32)
        running_mean = jnp.zeros((c_in,), jnp.float32)
        running_var = jnp.ones((c_in,), jnp.float32)
        scale = gamma / jnp.sqrt(running_var + eps)
        shift = beta - running_mean * scale
        params.append(dict(w_oik=w_oik, bias=bias, scale=scale, shift=shift))
    return params


def reference_forward(x_ncl, params, *, kernel, stride, activation=True):
    """Pure-JAX reference (mirrors the PyTorch Sequential)."""
    y = x_ncl
    for i, prm in enumerate(params):
        y = y * prm["scale"][None, :, None] + prm["shift"][None, :, None]
        if activation and i > 0:
            y = jnp.where(y >= 0.0, y, 0.01 * y)
        y = jax.lax.conv_general_dilated(
            y, prm["w_oik"], window_strides=(stride,), padding="VALID",
            dimension_numbers=("NCH", "OIH", "NCH"),
            precision=jax.lax.Precision.HIGHEST) + prm["bias"][None, :, None]
    return y


if __name__ == "__main__":
    # LayeredCNNTree(layer_count=3, channel_list=[4, 8, 6], kernel=3, stride=2,
    #                dropout=0, activation=True, batch_norm=[True, True])
    layer_count, channel_list, kernel, stride = 3, [4, 8, 6], 3, 2
    B, L = 2, 64

    key = jax.random.PRNGKey(0)
    kx, kp = jax.random.split(key)
    x = jax.random.normal(kx, (B, channel_list[0], L), jnp.float32)
    params = init_params(kp, layer_count, channel_list, kernel)

    fwd = jax.jit(functools.partial(layered_cnn_tree_forward,
                                    kernel=kernel, stride=stride))
    out = jax.block_until_ready(fwd(x, params))

    ref = reference_forward(x, params, kernel=kernel, stride=stride)
    assert out.shape == ref.shape, (out.shape, ref.shape)
    np.testing.assert_allclose(np.asarray(out), np.asarray(ref),
                               rtol=2e-3, atol=2e-3)
    print("KERNEL_OK")
</pallas_src>

<mosaic_0001>
module attributes {stable_mosaic.version = 11 : i64} {
  func.func @kern(%arg0: i32, %arg1: memref<2x4x64xf32, #tpu.memory_space<vmem>>, %arg2: memref<8x24xf32, #tpu.memory_space<vmem>>, %arg3: memref<8x1xf32, #tpu.memory_space<vmem>>, %arg4: memref<4x1xf32, #tpu.memory_space<vmem>>, %arg5: memref<4x1xf32, #tpu.memory_space<vmem>>, %arg6: memref<8x24xf32, #tpu.memory_space<vmem>>, %arg7: memref<8x1xf32, #tpu.memory_space<vmem>>, %arg8: memref<8x1xf32, #tpu.memory_space<vmem>>, %arg9: memref<8x1xf32, #tpu.memory_space<vmem>>, %arg10: memref<6x24xf32, #tpu.memory_space<vmem>>, %arg11: memref<6x1xf32, #tpu.memory_space<vmem>>, %arg12: memref<8x1xf32, #tpu.memory_space<vmem>>, %arg13: memref<8x1xf32, #tpu.memory_space<vmem>>, %arg14: memref<128x14xf32, #tpu.memory_space<vmem>>, %arg15: memref<2x6x7xf32, #tpu.memory_space<vmem>>, %arg16: memref<4x128xf32, #tpu.memory_space<vmem>>, %arg17: memref<8x128xf32, #tpu.memory_space<vmem>>, %arg18: memref<8x128xf32, #tpu.memory_space<vmem>>, %arg19: memref<24x128xf32, #tpu.memory_space<vmem>>) attributes {dimension_semantics = [#tpu.dimension_semantics<arbitrary>], iteration_bounds = array<i64: 1>, scalar_prefetch = 0 : i64, scratch_operands = 4 : i64, tpu.core_type = #tpu.core_type<tc>, window_params = [{pipeline_mode = #tpu.pipeline_mode<synchronous>, transform_indices = @transform_0, window_bounds = array<i64: 2, 4, 64>}, {pipeline_mode = #tpu.pipeline_mode<synchronous>, transform_indices = @transform_1, window_bounds = array<i64: 8, 24>}, {pipeline_mode = #tpu.pipeline_mode<synchronous>, transform_indices = @transform_2, window_bounds = array<i64: 8, 1>}, {pipeline_mode = #tpu.pipeline_mode<synchronous>, transform_indices = @transform_3, window_bounds = array<i64: 4, 1>}, {pipeline_mode = #tpu.pipeline_mode<synchronous>, transform_indices = @transform_4, window_bounds = array<i64: 4, 1>}, {pipeline_mode = #tpu.pipeline_mode<synchronous>, transform_indices = @transform_5, window_bounds = array<i64: 8, 24>}, {pipeline_mode = #tpu.pipeline_mode<synchronous>, transform_indices = @transform_6, window_bounds = array<i64: 8, 1>}, {pipeline_mode = #tpu.pipeline_mode<synchronous>, transform_indices = @transform_7, window_bounds = array<i64: 8, 1>}, {pipeline_mode = #tpu.pipeline_mode<synchronous>, transform_indices = @transform_8, window_bounds = array<i64: 8, 1>}, {pipeline_mode = #tpu.pipeline_mode<synchronous>, transform_indices = @transform_9, window_bounds = array<i64: 6, 24>}, {pipeline_mode = #tpu.pipeline_mode<synchronous>, transform_indices = @transform_10, window_bounds = array<i64: 6, 1>}, {pipeline_mode = #tpu.pipeline_mode<synchronous>, transform_indices = @transform_11, window_bounds = array<i64: 8, 1>}, {pipeline_mode = #tpu.pipeline_mode<synchronous>, transform_indices = @transform_12, window_bounds = array<i64: 8, 1>}, {pipeline_mode = #tpu.pipeline_mode<synchronous>, transform_indices = @transform_13, window_bounds = array<i64: 128, 14>}, {pipeline_mode = #tpu.pipeline_mode<synchronous>, transform_indices = @transform_14, window_bounds = array<i64: 2, 6, 7>}]} {
    %cst = arith.constant 0.000000e+00 : f32
    %0 = vector.broadcast %cst : f32 to vector<24x128xf32>
    %c0 = arith.constant 0 : index
    %c0_0 = arith.constant 0 : index
    %1 = vector.load %arg19[%c0, %c0_0] : memref<24x128xf32, #tpu.memory_space<vmem>>, vector<24x128xf32>
    tpu.vector_store %arg19[%c0, %c0_0], %0 {strides = array<i32>} : memref<24x128xf32, #tpu.memory_space<vmem>>, vector<24x128xf32>,
    %c0_1 = arith.constant 0 : index
    %c0_2 = arith.constant 0 : index
    %2 = vector.load %arg4[%c0_1, %c0_2] : memref<4x1xf32, #tpu.memory_space<vmem>>, vector<4x1xf32>
    %c0_3 = arith.constant 0 : index
    %c0_4 = arith.constant 0 : index
    %3 = vector.load %arg5[%c0_3, %c0_4] : memref<4x1xf32, #tpu.memory_space<vmem>>, vector<4x1xf32>
    %c0_5 = arith.constant 0 : index
    %c0_6 = arith.constant 0 : index
    %c0_7 = arith.constant 0 : index
    %4 = vector.load %arg1[%c0_5, %c0_6, %c0_7] : memref<2x4x64xf32, #tpu.memory_space<vmem>>, vector<2x4x64xf32>
    %5 = vector.extract_strided_slice %4 {offsets = [0, 0, 0], sizes = [1, 4, 64], strides = [1, 1, 1]} : vector<2x4x64xf32> to vector<1x4x64xf32>
    %6 = vector.shape_cast %5 : vector<1x4x64xf32> to vector<4x64xf32>
    %7 = vector.broadcast %2 : vector<4x1xf32> to vector<4x64xf32>
    %8 = arith.mulf %6, %7 : vector<4x64xf32>
    %9 = vector.broadcast %3 : vector<4x1xf32> to vector<4x64xf32>
    %10 = arith.addf %8, %9 : vector<4x64xf32>
    %c0_8 = arith.constant 0 : index
    %c0_9 = arith.constant 0 : index
    %11 = vector.load %arg16[%c0_8, %c0_9] : memref<4x128xf32, #tpu.memory_space<vmem>>, vector<4x64xf32>
    tpu.vector_store %arg16[%c0_8, %c0_9], %10 {strides = array<i32>} : memref<4x128xf32, #tpu.memory_space<vmem>>, vector<4x64xf32>,
    %12 = vector.extract_strided_slice %4 {offsets = [1, 0, 0], sizes = [1, 4, 64], strides = [1, 1, 1]} : vector<2x4x64xf32> to vector<1x4x64xf32>
    %13 = vector.shape_cast %12 : vector<1x4x64xf32> to vector<4x64xf32>
    %14 = vector.broadcast %2 : vector<4x1xf32> to vector<4x64xf32>
    %15 = arith.mulf %13, %14 : vector<4x64xf32>
    %16 = vector.broadcast %3 : vector<4x1xf32> to vector<4x64xf32>
    %17 = arith.addf %15, %16 : vector<4x64xf32>
    %c0_10 = arith.constant 0 : index
    %c64 = arith.constant 64 : index
    %18 = vector.load %arg16[%c0_10, %c64] : memref<4x128xf32, #tpu.memory_space<vmem>>, vector<4x64xf32>
    tpu.vector_store %arg16[%c0_10, %c64], %17 {strides = array<i32>} : memref<4x128xf32, #tpu.memory_space<vmem>>, vector<4x64xf32>,
    %c0_11 = arith.constant 0 : index
    %c0_12 = arith.constant 0 : index
    %19 = vector.load %arg2[%c0_11, %c0_12] : memref<8x24xf32, #tpu.memory_space<vmem>>, vector<8x24xf32>
    %c0_13 = arith.constant 0 : index
    %c0_14 = arith.constant 0 : index
    %20 = vector.load %arg3[%c0_13, %c0_14] : memref<8x1xf32, #tpu.memory_space<vmem>>, vector<8x1xf32>
    %c0_15 = arith.constant 0 : index
    %c0_16 = arith.constant 0 : index
    %21 = vector.load %arg16[%c0_15, %c0_16] : memref<4x128xf32, #tpu.memory_space<vmem>>, vector<4x128xf32>
    %c0_17 = arith.constant 0 : index
    %c0_18 = arith.constant 0 : index
    %22 = vector.load %arg19[%c0_17, %c0_18] : memref<24x128xf32, #tpu.memory_space<vmem>>, vector<4x128xf32>
    tpu.vector_store %arg19[%c0_17, %c0_18], %21 {strides = array<i32>} : memref<24x128xf32, #tpu.memory_space<vmem>>, vector<4x128xf32>,
    %23 = vector.extract_strided_slice %21 {offsets = [0, 1], sizes = [4, 127], strides = [1, 1]} : vector<4x128xf32> to vector<4x127xf32>
    %c8 = arith.constant 8 : index
    %c0_19 = arith.constant 0 : index
    %24 = vector.load %arg19[%c8, %c0_19] : memref<24x128xf32, #tpu.memory_space<vmem>>, vector<4x127xf32>
    tpu.vector_store %arg19[%c8, %c0_19], %23 {strides = array<i32>} : memref<24x128xf32, #tpu.memory_space<vmem>>, vector<4x127xf32>,
    %25 = vector.extract_strided_slice %21 {offsets = [0, 2], sizes = [4, 126], strides = [1, 1]} : vector<4x128xf32> to vector<4x126xf32>
    %c16 = arith.constant 16 : index
    %c0_20 = arith.constant 0 : index
    %26 = vector.load %arg19[%c16, %c0_20] : memref<24x128xf32, #tpu.memory_space<vmem>>, vector<4x126xf32>
    tpu.vector_store %arg19[%c16, %c0_20], %25 {strides = array<i32>} : memref<24x128xf32, #tpu.memory_space<vmem>>, vector<4x126xf32>,
    %c0_21 = arith.constant 0 : index
    %c0_22 = arith.constant 0 : index
    %27 = vector.load %arg19[%c0_21, %c0_22] : memref<24x128xf32, #tpu.memory_space<vmem>>, vector<24x128xf32>
    %cst_23 = arith.constant dense<0.000000e+00> : vector<8x128xf32>
    %28 = tpu.matmul %19, %27, %cst_23 {dimension_numbers = #tpu.dot_dimension_numbers<[1], [0], [0], [1], [0, 0, 1, 1], [], []>, precision = #tpu.contract_precision<fp32>} : vector<8x24xf32>, vector<24x128xf32>, vector<8x128xf32> -> vector<8x128xf32>
    %29 = vector.broadcast %20 : vector<8x1xf32> to vector<8x128xf32>
    %30 = arith.addf %28, %29 : vector<8x128xf32>
    %c0_24 = arith.constant 0 : index
    %c0_25 = arith.constant 0 : index
    %31 = vector.load %arg8[%c0_24, %c0_25] : memref<8x1xf32, #tpu.memory_space<vmem>>, vector<8x1xf32>
    %32 = vector.broadcast %31 : vector<8x1xf32> to vector<8x128xf32>
    %33 = arith.mulf %30, %32 : vector<8x128xf32>
    %c0_26 = arith.constant 0 : index
    %c0_27 = arith.constant 0 : index
    %34 = vector.load %arg9[%c0_26, %c0_27] : memref<8x1xf32, #tpu.memory_space<vmem>>, vector<8x1xf32>
    %35 = vector.broadcast %34 : vector<8x1xf32> to vector<8x128xf32>
    %36 = arith.addf %33, %35 : vector<8x128xf32>
    %cst_28 = arith.constant 0.000000e+00 : f32
    %37 = vector.broadcast %cst_28 : f32 to vector<8x128xf32>
    %38 = arith.cmpf oge, %36, %37 : vector<8x128xf32>
    %cst_29 = arith.constant 0.00999999977 : f32
    %39 = vector.broadcast %cst_29 : f32 to vector<8x128xf32>
    %40 = arith.mulf %39, %36 : vector<8x128xf32>
    %41 = arith.select %38, %36, %40 : vector<8x128xi1>, vector<8x128xf32>
    %c0_30 = arith.constant 0 : index
    %c0_31 = arith.constant 0 : index
    %42 = vector.load %arg17[%c0_30, %c0_31] : memref<8x128xf32, #tpu.memory_space<vmem>>, vector<8x128xf32>
    tpu.vector_store %arg17[%c0_30, %c0_31], %41 {strides = array<i32>} : memref<8x128xf32, #tpu.memory_space<vmem>>, vector<8x128xf32>,
    %c0_32 = arith.constant 0 : index
    %c0_33 = arith.constant 0 : index
    %43 = vector.load %arg6[%c0_32, %c0_33] : memref<8x24xf32, #tpu.memory_space<vmem>>, vector<8x24xf32>
    %c0_34 = arith.constant 0 : index
    %c0_35 = arith.constant 0 : index
    %44 = vector.load %arg7[%c0_34, %c0_35] : memref<8x1xf32, #tpu.memory_space<vmem>>, vector<8x1xf32>
    %c0_36 = arith.constant 0 : index
    %c0_37 = arith.constant 0 : index
    %45 = vector.load %arg17[%c0_36, %c0_37] : memref<8x128xf32, #tpu.memory_space<vmem>>, vector<8x128xf32>
    %c0_38 = arith.constant 0 : index
    %c0_39 = arith.constant 0 : index
    %46 = vector.load %arg19[%c0_38, %c0_39] : memref<24x128xf32, #tpu.memory_space<vmem>>, vector<8x128xf32>
    tpu.vector_store %arg19[%c0_38, %c0_39], %45 {strides = array<i32>} : memref<24x128xf32, #tpu.memory_space<vmem>>, vector<8x128xf32>,
    %47 = vector.extract_strided_slice %45 {offsets = [0, 2], sizes = [8, 126], strides = [1, 1]} : vector<8x128xf32> to vector<8x126xf32>
    %c8_40 = arith.constant 8 : index
    %c0_41 = arith.constant 0 : index
    %48 = vector.load %arg19[%c8_40, %c0_41] : memref<24x128xf32, #tpu.memory_space<vmem>>, vector<8x126xf32>
    tpu.vector_store %arg19[%c8_40, %c0_41], %47 {strides = array<i32>} : memref<24x128xf32, #tpu.memory_space<vmem>>, vector<8x126xf32>,
    %49 = vector.extract_strided_slice %45 {offsets = [0, 4], sizes = [8, 124], strides = [1, 1]} : vector<8x128xf32> to vector<8x124xf32>
    %c16_42 = arith.constant 16 : index
    %c0_43 = arith.constant 0 : index
    %50 = vector.load %arg19[%c16_42, %c0_43] : memref<24x128xf32, #tpu.memory_space<vmem>>, vector<8x124xf32>
    tpu.vector_store %arg19[%c16_42, %c0_43], %49 {strides = array<i32>} : memref<24x128xf32, #tpu.memory_space<vmem>>, vector<8x124xf32>,
    %c0_44 = arith.constant 0 : index
    %c0_45 = arith.constant 0 : index
    %51 = vector.load %arg19[%c0_44, %c0_45] : memref<24x128xf32, #tpu.memory_space<vmem>>, vector<24x128xf32>
    %cst_46 = arith.constant dense<0.000000e+00> : vector<8x128xf32>
    %52 = tpu.matmul %43, %51, %cst_46 {dimension_numbers = #tpu.dot_dimension_numbers<[1], [0], [0], [1], [0, 0, 1, 1], [], []>, precision = #tpu.contract_precision<fp32>} : vector<8x24xf32>, vector<24x128xf32>, vector<8x128xf32> -> vector<8x128xf32>
    %53 = vector.broadcast %44 : vector<8x1xf32> to vector<8x128xf32>
    %54 = arith.addf %52, %53 : vector<8x128xf32>
    %c0_47 = arith.constant 0 : index
    %c0_48 = arith.constant 0 : index
    %55 = vector.load %arg12[%c0_47, %c0_48] : memref<8x1xf32, #tpu.memory_space<vmem>>, vector<8x1xf32>
    %56 = vector.broadcast %55 : vector<8x1xf32> to vector<8x128xf32>
    %57 = arith.mulf %54, %56 : vector<8x128xf32>
    %c0_49 = arith.constant 0 : index
    %c0_50 = arith.constant 0 : index
    %58 = vector.load %arg13[%c0_49, %c0_50] : memref<8x1xf32, #tpu.memory_space<vmem>>, vector<8x1xf32>
    %59 = vector.broadcast %58 : vector<8x1xf32> to vector<8x128xf32>
    %60 = arith.addf %57, %59 : vector<8x128xf32>
    %cst_51 = arith.constant 0.000000e+00 : f32
    %61 = vector.broadcast %cst_51 : f32 to vector<8x128xf32>
    %62 = arith.cmpf oge, %60, %61 : vector<8x128xf32>
    %cst_52 = arith.constant 0.00999999977 : f32
    %63 = vector.broadcast %cst_52 : f32 to vector<8x128xf32>
    %64 = arith.mulf %63, %60 : vector<8x128xf32>
    %65 = arith.select %62, %60, %64 : vector<8x128xi1>, vector<8x128xf32>
    %c0_53 = arith.constant 0 : index
    %c0_54 = arith.constant 0 : index
    %66 = vector.load %arg18[%c0_53, %c0_54] : memref<8x128xf32, #tpu.memory_space<vmem>>, vector<8x128xf32>
    tpu.vector_store %arg18[%c0_53, %c0_54], %65 {strides = array<i32>} : memref<8x128xf32, #tpu.memory_space<vmem>>, vector<8x128xf32>,
    %c0_55 = arith.constant 0 : index
    %c0_56 = arith.constant 0 : index
    %67 = vector.load %arg10[%c0_55, %c0_56] : memref<6x24xf32, #tpu.memory_space<vmem>>, vector<6x24xf32>
    %c0_57 = arith.constant 0 : index
    %c0_58 = arith.constant 0 : index
    %68 = vector.load %arg11[%c0_57, %c0_58] : memref<6x1xf32, #tpu.memory_space<vmem>>, vector<6x1xf32>
    %c0_59 = arith.constant 0 : index
    %c0_60 = arith.constant 0 : index
    %69 = vector.load %arg18[%c0_59, %c0_60] : memref<8x128xf32, #tpu.memory_space<vmem>>, vector<8x128xf32>
    %c0_61 = arith.constant 0 : index
    %c0_62 = arith.constant 0 : index
    %70 = vector.load %arg19[%c0_61, %c0_62] : memref<24x128xf32, #tpu.memory_space<vmem>>, vector<8x128xf32>
    tpu.vector_store %arg19[%c0_61, %c0_62], %69 {strides = array<i32>} : memref<24x128xf32, #tpu.memory_space<vmem>>, vector<8x128xf32>,
    %71 = vector.extract_strided_slice %69 {offsets = [0, 4], sizes = [8, 124], strides = [1, 1]} : vector<8x128xf32> to vector<8x124xf32>
    %c8_63 = arith.constant 8 : index
    %c0_64 = arith.constant 0 : index
    %72 = vector.load %arg19[%c8_63, %c0_64] : memref<24x128xf32, #tpu.memory_space<vmem>>, vector<8x124xf32>
    tpu.vector_store %arg19[%c8_63, %c0_64], %71 {strides = array<i32>} : memref<24x128xf32, #tpu.memory_space<vmem>>, vector<8x124xf32>,
    %73 = vector.extract_strided_slice %69 {offsets = [0, 8], sizes = [8, 120], strides = [1, 1]} : vector<8x128xf32> to vector<8x120xf32>
    %c16_65 = arith.constant 16 : index
    %c0_66 = arith.constant 0 : index
    %74 = vector.load %arg19[%c16_65, %c0_66] : memref<24x128xf32, #tpu.memory_space<vmem>>, vector<8x120xf32>
    tpu.vector_store %arg19[%c16_65, %c0_66], %73 {strides = array<i32>} : memref<24x128xf32, #tpu.memory_space<vmem>>, vector<8x120xf32>,
    %c0_67 = arith.constant 0 : index
    %c0_68 = arith.constant 0 : index
    %75 = vector.load %arg19[%c0_67, %c0_68] : memref<24x128xf32, #tpu.memory_space<vmem>>, vector<24x128xf32>
    %cst_69 = arith.constant dense<0.000000e+00> : vector<6x128xf32>
    %76 = tpu.matmul %67, %75, %cst_69 {dimension_numbers = #tpu.dot_dimension_numbers<[1], [0], [0], [1], [0, 0, 1, 1], [], []>, precision = #tpu.contract_precision<fp32>} : vector<6x24xf32>, vector<24x128xf32>, vector<6x128xf32> -> vector<6x128xf32>
    %77 = vector.broadcast %68 : vector<6x1xf32> to vector<6x128xf32>
    %78 = arith.addf %76, %77 : vector<6x128xf32>
    %c0_70 = arith.constant 0 : index
    %c0_71 = arith.constant 0 : index
    %79 = vector.load %arg14[%c0_70, %c0_71] : memref<128x14xf32, #tpu.memory_space<vmem>>, vector<128x14xf32>
    %cst_72 = arith.constant dense<0.000000e+00> : vector<6x14xf32>
    %80 = tpu.matmul %78, %79, %cst_72 {dimension_numbers = #tpu.dot_dimension_numbers<[1], [0], [0], [1], [0, 0, 1, 1], [], []>, precision = #tpu.contract_precision<fp32>} : vector<6x128xf32>, vector<128x14xf32>, vector<6x14xf32> -> vector<6x14xf32>
    %81 = vector.extract_strided_slice %80 {offsets = [0, 0], sizes = [6, 7], strides = [1, 1]} : vector<6x14xf32> to vector<6x7xf32>
    %c0_73 = arith.constant 0 : index
    %c0_74 = arith.constant 0 : index
    %c0_75 = arith.constant 0 : index
    %82 = vector.load %arg15[%c0_73, %c0_74, %c0_75] : memref<2x6x7xf32, #tpu.memory_space<vmem>>, vector<1x6x7xf32>
    %83 = vector.shape_cast %82 : vector<1x6x7xf32> to vector<6x7xf32>
    %84 = vector.shape_cast %81 : vector<6x7xf32> to vector<1x6x7xf32>
    tpu.vector_store %arg15[%c0_73, %c0_74, %c0_75], %84 {strides = array<i32>} : memref<2x6x7xf32, #tpu.memory_space<vmem>>, vector<1x6x7xf32>,
    %85 = vector.extract_strided_slice %80 {offsets = [0, 7], sizes = [6, 7], strides = [1, 1]} : vector<6x14xf32> to vector<6x7xf32>
    %c1 = arith.constant 1 : index
    %c0_76 = arith.constant 0 : index
    %c0_77 = arith.constant 0 : index
    %86 = vector.load %arg15[%c1, %c0_76, %c0_77] : memref<2x6x7xf32, #tpu.memory_space<vmem>>, vector<1x6x7xf32>
    %87 = vector.shape_cast %86 : vector<1x6x7xf32> to vector<6x7xf32>
    %88 = vector.shape_cast %85 : vector<6x7xf32> to vector<1x6x7xf32>
    tpu.vector_store %arg15[%c1, %c0_76, %c0_77], %88 {strides = array<i32>} : memref<2x6x7xf32, #tpu.memory_space<vmem>>, vector<1x6x7xf32>,
    return
  }
  func.func @transform_0(%arg0: i32) -> (i32, i32, i32) {
    %c0_i32 = arith.constant 0 : i32
    %c0_i32_0 = arith.constant 0 : i32
    %c0_i32_1 = arith.constant 0 : i32
    %c0_i32_2 = arith.constant 0 : i32
    return %c0_i32, %c0_i32_0, %c0_i32_1 : i32, i32, i32
  }
  func.func @transform_1(%arg0: i32) -> (i32, i32) {
    %c0_i32 = arith.constant 0 : i32
    %c0_i32_0 = arith.constant 0 : i32
    %c0_i32_1 = arith.constant 0 : i32
    return %c0_i32, %c0_i32_0 : i32, i32
  }
  func.func @transform_2(%arg0: i32) -> (i32, i32) {
    %c0_i32 = arith.constant 0 : i32
    %c0_i32_0 = arith.constant 0 : i32
    %c0_i32_1 = arith.constant 0 : i32
    return %c0_i32, %c0_i32_0 : i32, i32
  }
  func.func @transform_3(%arg0: i32) -> (i32, i32) {
    %c0_i32 = arith.constant 0 : i32
    %c0_i32_0 = arith.constant 0 : i32
    %c0_i32_1 = arith.constant 0 : i32
    return %c0_i32, %c0_i32_0 : i32, i32
  }
  func.func @transform_4(%arg0: i32) -> (i32, i32) {
    %c0_i32 = arith.constant 0 : i32
    %c0_i32_0 = arith.constant 0 : i32
    %c0_i32_1 = arith.constant 0 : i32
    return %c0_i32, %c0_i32_0 : i32, i32
  }
  func.func @transform_5(%arg0: i32) -> (i32, i32) {
    %c0_i32 = arith.constant 0 : i32
    %c0_i32_0 = arith.constant 0 : i32
    %c0_i32_1 = arith.constant 0 : i32
    return %c0_i32, %c0_i32_0 : i32, i32
  }
  func.func @transform_6(%arg0: i32) -> (i32, i32) {
    %c0_i32 = arith.constant 0 : i32
    %c0_i32_0 = arith.constant 0 : i32
    %c0_i32_1 = arith.constant 0 : i32
    return %c0_i32, %c0_i32_0 : i32, i32
  }
  func.func @transform_7(%arg0: i32) -> (i32, i32) {
    %c0_i32 = arith.constant 0 : i32
    %c0_i32_0 = arith.constant 0 : i32
    %c0_i32_1 = arith.constant 0 : i32
    return %c0_i32, %c0_i32_0 : i32, i32
  }
  func.func @transform_8(%arg0: i32) -> (i32, i32) {
    %c0_i32 = arith.constant 0 : i32
    %c0_i32_0 = arith.constant 0 : i32
    %c0_i32_1 = arith.constant 0 : i32
    return %c0_i32, %c0_i32_0 : i32, i32
  }
  func.func @transform_9(%arg0: i32) -> (i32, i32) {
    %c0_i32 = arith.constant 0 : i32
    %c0_i32_0 = arith.constant 0 : i32
    %c0_i32_1 = arith.constant 0 : i32
    return %c0_i32, %c0_i32_0 : i32, i32
  }
  func.func @transform_10(%arg0: i32) -> (i32, i32) {
    %c0_i32 = arith.constant 0 : i32
    %c0_i32_0 = arith.constant 0 : i32
    %c0_i32_1 = arith.constant 0 : i32
    return %c0_i32, %c0_i32_0 : i32, i32
  }
  func.func @transform_11(%arg0: i32) -> (i32, i32) {
    %c0_i32 = arith.constant 0 : i32
    %c0_i32_0 = arith.constant 0 : i32
    %c0_i32_1 = arith.constant 0 : i32
    return %c0_i32, %c0_i32_0 : i32, i32
  }
  func.func @transform_12(%arg0: i32) -> (i32, i32) {
    %c0_i32 = arith.constant 0 : i32
    %c0_i32_0 = arith.constant 0 : i32
    %c0_i32_1 = arith.constant 0 : i32
    return %c0_i32, %c0_i32_0 : i32, i32
  }
  func.func @transform_13(%arg0: i32) -> (i32, i32) {
    %c0_i32 = arith.constant 0 : i32
    %c0_i32_0 = arith.constant 0 : i32
    %c0_i32_1 = arith.constant 0 : i32
    return %c0_i32, %c0_i32_0 : i32, i32
  }
  func.func @transform_14(%arg0: i32) -> (i32, i32, i32) {
    %c0_i32 = arith.constant 0 : i32
    %c0_i32_0 = arith.constant 0 : i32
    %c0_i32_1 = arith.constant 0 : i32
    %c0_i32_2 = arith.constant 0 : i32
    return %c0_i32, %c0_i32_0, %c0_i32_1 : i32, i32, i32
  }
}

</mosaic_0001>

<llo_original>
// kernel: layered_cnn_tree_forward.1
$region0: #{layered_cnn_tree_forward.1}
  #allocation0 [shape = 'u32[]', space=smem, size = 0x4, offset = 0x4, fixed_abs, tag = 'smem constant byte address 0x4 - core index']
  #allocation1 [shape = 'u32[144,128]{1,0:T(1,128)}', space=vmem, size = 0x12000, scoped, tag = 'internal scratch']
  #allocation2 [shape = 'f32[4,128]{1,0:T(4,128)}', space=vmem, size = 0x800, scoped, tag = 'scratch operand']
  #allocation3 [shape = 'f32[8,128]{1,0:T(8,128)}', space=vmem, size = 0x1000, scoped, tag = 'scratch operand']
  #allocation4 [shape = 'f32[8,128]{1,0:T(8,128)}', space=vmem, size = 0x1000, scoped, tag = 'scratch operand']
  #allocation5 [shape = 'f32[24,128]{1,0:T(8,128)}', space=vmem, size = 0x3000, scoped, tag = 'scratch operand']
  %s0 = inlined_call_operand.vmem [shape: f32[2,4,64], index: 0, kind: input, shape index: {}]
  %s1 = inlined_call_operand.vmem [shape: f32[8,24], index: 1, kind: input, shape index: {}]
  %s2 = inlined_call_operand.vmem [shape: f32[8,1], index: 2, kind: input, shape index: {}]
  %s3 = inlined_call_operand.vmem [shape: f32[4,1], index: 3, kind: input, shape index: {}]
  %s4 = inlined_call_operand.vmem [shape: f32[4,1], index: 4, kind: input, shape index: {}]
  %s5 = inlined_call_operand.vmem [shape: f32[8,24], index: 5, kind: input, shape index: {}]
  %s6 = inlined_call_operand.vmem [shape: f32[8,1], index: 6, kind: input, shape index: {}]
  %s7 = inlined_call_operand.vmem [shape: f32[8,1], index: 7, kind: input, shape index: {}]
  %s8 = inlined_call_operand.vmem [shape: f32[8,1], index: 8, kind: input, shape index: {}]
  %s9 = inlined_call_operand.vmem [shape: f32[6,24], index: 9, kind: input, shape index: {}]
  %s10 = inlined_call_operand.vmem [shape: f32[6,1], index: 10, kind: input, shape index: {}]
  %s11 = inlined_call_operand.vmem [shape: f32[8,1], index: 11, kind: input, shape index: {}]
  %s12 = inlined_call_operand.vmem [shape: f32[8,1], index: 12, kind: input, shape index: {}]
  %s13 = inlined_call_operand.vmem [shape: f32[128,14], index: 13, kind: input, shape index: {}]
  %s14 = inlined_call_operand.vmem [shape: f32[2,6,7], index: 14, kind: output, shape index: {}]
  %s15 = sld [smem:[#allocation0]]
  $region66: #{layered_cnn_tree_forward.1} parent=0
    _
  %s17 = ssub.s32 1, %s15
  %s18 = scalar_select 0, %s17, %s15
  // Predicated region
  $region2: #{layered_cnn_tree_forward.1} parent=0 // pred_check
    _
  $region3: #{layered_cnn_tree_forward.1} parent=0 // pred_check_branch
    %20 = sbr.rel (0) target = $region5
  $region4: #{layered_cnn_tree_forward.1} parent=0 // pred_region
    _
  $region5: #{layered_cnn_tree_forward.1} parent=0 // pred_fallthru
    _
  // Predicated region
  $region6: #{layered_cnn_tree_forward.1} parent=0 // pred_check
    _
  $region7: #{layered_cnn_tree_forward.1} parent=0 // pred_check_branch
    %22 = sbr.rel (0) target = $region9
  $region8: #{layered_cnn_tree_forward.1} parent=0 // pred_region
    _
  $region9: #{layered_cnn_tree_forward.1} parent=0 // pred_fallthru
    _
  // Predicated region
  $region10: #{layered_cnn_tree_forward.1} parent=0 // pred_check
    _
  $region11: #{layered_cnn_tree_forward.1} parent=0 // pred_check_branch
    %24 = sbr.rel (0) target = $region13
  $region12: #{layered_cnn_tree_forward.1} parent=0 // pred_region
    _
  $region13: #{layered_cnn_tree_forward.1} parent=0 // pred_fallthru
    _
  // Predicated region
  $region14: #{layered_cnn_tree_forward.1} parent=0 // pred_check
    _
  $region15: #{layered_cnn_tree_forward.1} parent=0 // pred_check_branch
    %26 = sbr.rel (0) target = $region17
  $region16: #{layered_cnn_tree_forward.1} parent=0 // pred_region
    _
  $region17: #{layered_cnn_tree_forward.1} parent=0 // pred_fallthru
    _
  // Predicated region
  $region18: #{layered_cnn_tree_forward.1} parent=0 // pred_check
    _
  $region19: #{layered_cnn_tree_forward.1} parent=0 // pred_check_branch
    %28 = sbr.rel (0) target = $region21
  $region20: #{layered_cnn_tree_forward.1} parent=0 // pred_region
    _
  $region21: #{layered_cnn_tree_forward.1} parent=0 // pred_fallthru
    _
  // Predicated region
  $region22: #{layered_cnn_tree_forward.1} parent=0 // pred_check
    _
  $region23: #{layered_cnn_tree_forward.1} parent=0 // pred_check_branch
    %30 = sbr.rel (0) target = $region25
  $region24: #{layered_cnn_tree_forward.1} parent=0 // pred_region
    _
  $region25: #{layered_cnn_tree_forward.1} parent=0 // pred_fallthru
    _
  // Predicated region
  $region26: #{layered_cnn_tree_forward.1} parent=0 // pred_check
    _
  $region27: #{layered_cnn_tree_forward.1} parent=0 // pred_check_branch
    %32 = sbr.rel (0) target = $region29
  $region28: #{layered_cnn_tree_forward.1} parent=0 // pred_region
    _
  $region29: #{layered_cnn_tree_forward.1} parent=0 // pred_fallthru
    _
  // Predicated region
  $region30: #{layered_cnn_tree_forward.1} parent=0 // pred_check
    _
  $region31: #{layered_cnn_tree_forward.1} parent=0 // pred_check_branch
    %34 = sbr.rel (0) target = $region33
  $region32: #{layered_cnn_tree_forward.1} parent=0 // pred_region
    _
  $region33: #{layered_cnn_tree_forward.1} parent=0 // pred_fallthru
    _
  // Predicated region
  $region34: #{layered_cnn_tree_forward.1} parent=0 // pred_check
    _
  $region35: #{layered_cnn_tree_forward.1} parent=0 // pred_check_branch
    %36 = sbr.rel (0) target = $region37
  $region36: #{layered_cnn_tree_forward.1} parent=0 // pred_region
    _
  $region37: #{layered_cnn_tree_forward.1} parent=0 // pred_fallthru
    _
  // Predicated region
  $region38: #{layered_cnn_tree_forward.1} parent=0 // pred_check
    _
  $region39: #{layered_cnn_tree_forward.1} parent=0 // pred_check_branch
    %38 = sbr.rel (0) target = $region41
  $region40: #{layered_cnn_tree_forward.1} parent=0 // pred_region
    _
  $region41: #{layered_cnn_tree_forward.1} parent=0 // pred_fallthru
    _
  // Predicated region
  $region42: #{layered_cnn_tree_forward.1} parent=0 // pred_check
    _
  $region43: #{layered_cnn_tree_forward.1} parent=0 // pred_check_branch
    %40 = sbr.rel (0) target = $region45
  $region44: #{layered_cnn_tree_forward.1} parent=0 // pred_region
    _
  $region45: #{layered_cnn_tree_forward.1} parent=0 // pred_fallthru
    _
  // Predicated region
  $region46: #{layered_cnn_tree_forward.1} parent=0 // pred_check
    _
  $region47: #{layered_cnn_tree_forward.1} parent=0 // pred_check_branch
    %42 = sbr.rel (0) target = $region49
  $region48: #{layered_cnn_tree_forward.1} parent=0 // pred_region
    _
  $region49: #{layered_cnn_tree_forward.1} parent=0 // pred_fallthru
    _
  // Predicated region
  $region50: #{layered_cnn_tree_forward.1} parent=0 // pred_check
    _
  $region51: #{layered_cnn_tree_forward.1} parent=0 // pred_check_branch
    %44 = sbr.rel (0) target = $region53
  $region52: #{layered_cnn_tree_forward.1} parent=0 // pred_region
    _
  $region53: #{layered_cnn_tree_forward.1} parent=0 // pred_fallthru
    _
  // Predicated region
  $region54: #{layered_cnn_tree_forward.1} parent=0 // pred_check
    _
  $region55: #{layered_cnn_tree_forward.1} parent=0 // pred_check_branch
    %46 = sbr.rel (0) target = $region57
  $region56: #{layered_cnn_tree_forward.1} parent=0 // pred_region
    _
  $region57: #{layered_cnn_tree_forward.1} parent=0 // pred_fallthru
    _
  %47 = vst [vmem:[#allocation5] sm:$0xff] 0.0
  %48 = vst [vmem:[#allocation5 + $0x8] sm:$0xff] 0.0
  %49 = vst [vmem:[#allocation5 + $0x10] sm:$0xff] 0.0
  %v50 = vld [vmem:[%s3] sm:$0xf]
  %v51 = vld [vmem:[%s4] sm:$0xf]
  %v52 = vld [vmem:[%s0] sm:$0xf]
  %v53 = vld [vmem:[%s0 + $0x4] sm:$0xf]
  %55 = vset.pattern.permute.xlu0 0
  %56 = vperm.xlu0 %55, %v50
  %v57 = vpop.permute.xlu0 %56
  %v59 = vmul.f32 %v52, %v57
  %61 = vset.pattern.permute.xlu0 0
  %62 = vperm.xlu0 %61, %v51
  %v63 = vpop.permute.xlu0 %62
  %v65 = vadd.f32 %v59, %v63
  %vm66 = vcmask 519168
  %67 = vst.msk [vmem:[#allocation2] sm:$0xf] %vm66, %v65
  %v68 = vmul.f32 %v53, %v57
  %v69 = vadd.f32 %v68, %v63
  %71 = vrot.lane.b32.xlu0 %v69, 64
  %v72 = vpop.permute.xlu0 %71
  %vm74 = vcmask 1043968
  %75 = vst.msk [vmem:[#allocation2] sm:$0xf] %vm74, %v72
  %v76 = vld [vmem:[%s1] sm:$0xff]
  %v77 = vld [vmem:[%s2] sm:$0xff]
  %v78 = vld [vmem:[#allocation2] sm:$0xf]
  %79 = vst [vmem:[#allocation5] sm:$0xf] %v78
  %81 = vrot.lane.b32.xlu0 %v78, 127
  %v82 = vpop.permute.xlu0 %81
  %vm84 = vcmask 1035264
  %85 = vst.msk [vmem:[#allocation5 + $0x8] sm:$0xf] %vm84, %v82
  %86 = vrot.lane.b32.xlu0 %v78, 126
  %v87 = vpop.permute.xlu0 %86
  %vm89 = vcmask 1027072
  %90 = vst.msk [vmem:[#allocation5 + $0x10] sm:$0xf] %vm89, %v87
  %v91 = vld [vmem:[#allocation5] sm:$0xff]
  %v92 = vld [vmem:[#allocation5 + $0x8] sm:$0xff]
  %v93 = vld [vmem:[#allocation5 + $0x10] sm:$0xff]
  %95 = vset.pattern.permute.xlu0 0
  %96 = vperm.xlu0 %95, %v77
  %v97 = vpop.permute.xlu0 %96
  %vm99 = vcmask 195584
  %v101 = vsel %vm99, %v76, 0
  %103 = vmatprep.subr.mxu0 0.0
  %v104 = vand.u32 %v91, 4294901760
  %105 = vmatpush1.msra.mxu0 %v104
  %106 = vmatprep.subr.mxu0 0.0
  %v107 = vand.u32 %v92, 4294901760
  %108 = vmatpush1.msra.mxu0 %v107
  %109 = vmatprep.subr.mxu0 0.0
  %v110 = vand.u32 %v93, 4294901760
  %111 = vmatpush1.msra.mxu0 %v110
  %112 = vmatprep.subr.mxu0 0.0
  %113 = vmatpush1.msra.mxu0 0.0
  %114 = vmatprep.subr.mxu0 0.0
  %115 = vmatpush1.msra.mxu0 0.0
  %116 = vmatprep.subr.mxu0 0.0
  %117 = vmatpush1.msra.mxu0 0.0
  %118 = vmatprep.subr.mxu0 0.0
  %119 = vmatpush1.msra.mxu0 0.0
  %120 = vmatprep.subr.mxu0 0.0
  %121 = vmatpush1.msra.mxu0 0.0
  %122 = vmatprep.subr.mxu0 0.0
  %123 = vmatpush1.msra.mxu0 0.0
  %124 = vmatprep.subr.mxu0 0.0
  %125 = vmatpush1.msra.mxu0 0.0
  %126 = vmatprep.subr.mxu0 0.0
  %127 = vmatpush1.msra.mxu0 0.0
  %128 = vmatprep.subr.mxu0 0.0
  %129 = vmatpush1.msra.mxu0 0.0
  %130 = vmatprep.subr.mxu0 0.0
  %131 = vmatpush1.msra.mxu0 0.0
  %132 = vmatprep.subr.mxu0 0.0
  %133 = vmatpush1.msra.mxu0 0.0
  %134 = vmatprep.subr.mxu0 0.0
  %135 = vmatpush1.msra.mxu0 0.0
  %136 = vmatprep.subr.mxu0 0.0
  %137 = vmatpush1.msra.mxu0 0.0
  %138 = vmatprep.subr.mxu0 0.0
  %139 = vmatpush1.msra.mxu0 0.0
  %140 = vmatprep.subr.mxu0 0.0
  %141 = vmatpush1.msra.mxu0 0.0
  %142 = vmatprep.subr.mxu0 0.0
  %143 = vmatpush1.msra.mxu0 0.0
  %144 = vmatprep.subr.mxu0 0.0
  %145 = vmatpush1.msra.mxu0 0.0
  %146 = vmatprep.subr.mxu0 0.0
  %147 = vmatpush1.msra.mxu0 0.0
  %148 = vmatprep.subr.mxu0 0.0
  %149 = vmatpush1.msra.mxu0 0.0
  %150 = vmatprep.subr.mxu0 0.0
  %151 = vmatpush1.msra.mxu0 0.0
  %152 = vmatprep.subr.mxu0 0.0
  %153 = vmatpush1.msra.mxu0 0.0
  %154 = vmatprep.subr.mxu0 0.0
  %155 = vmatpush1.msra.mxu0 0.0
  %156 = vmatprep.subr.mxu0 0.0
  %157 = vmatpush1.msra.mxu0 0.0
  %158 = vmatprep.subr.mxu0 0.0
  %159 = vmatpush1.msra.mxu0 0.0
  %160 = vmatprep.subr.mxu0 0.0
  %161 = vmatpush1.msra.mxu0 0.0
  %162 = vmatprep.subr.mxu0 0.0
  %163 = vmatpush1.msra.mxu0 0.0
  %164 = vmatprep.subr.mxu0 0.0
  %165 = vmatpush1.msra.mxu0 0.0
  %166 = vmatprep.subr.mxu0 0.0
  %167 = vmatpush1.msra.mxu0 0.0
  %168 = vmatprep.subr.mxu0 0.0
  %169 = vmatpush1.msra.mxu0 0.0
  %170 = vmatprep.mubr.f32.mxu0 0.0
  %v171 = vand.u32 %v101, 4294901760
  %v172 = vsub.f32 %v101, %v171
  %v173 = vand.u32 %v172, 4294901760
  %v174 = vsub.f32 %v172, %v173
  %v175 = vand.u32 %v174, 4294901760
  %176 = vmatmul.mubr.f32.gmra.mrb[0].mxu0 %v175
  %v177 = vpop.f32.mrb[0].mxu0
  %v178 = vadd.f32 %v97, %v177
  %v179 = vpop.f32.mrb[0].mxu0
  %180 = vdwg.mxu0
  %181 = vmatprep.subr.mxu0 0.0
  %v182 = vand.u32 %v91, 4294901760
  %v183 = vsub.f32 %v91, %v182
  %v184 = vand.u32 %v183, 4294901760
  %v185 = vsub.f32 %v183, %v184
  %v186 = vand.u32 %v185, 4294901760
  %187 = vmatpush1.msra.mxu0 %v186
  %188 = vmatprep.subr.mxu0 0.0
  %v189 = vand.u32 %v92, 4294901760
  %v190 = vsub.f32 %v92, %v189
  %v191 = vand.u32 %v190, 4294901760
  %v192 = vsub.f32 %v190, %v191
  %v193 = vand.u32 %v192, 4294901760
  %194 = vmatpush1.msra.mxu0 %v193
  %195 = vmatprep.subr.mxu0 0.0
  %v196 = vand.u32 %v93, 4294901760
  %v197 = vsub.f32 %v93, %v196
  %v198 = vand.u32 %v197, 4294901760
  %v199 = vsub.f32 %v197, %v198
  %v200 = vand.u32 %v199, 4294901760
  %201 = vmatpush1.msra.mxu0 %v200
  %202 = vmatprep.subr.mxu0 0.0
  %203 = vmatpush1.msra.mxu0 0.0
  %204 = vmatprep.subr.mxu0 0.0
  %205 = vmatpush1.msra.mxu0 0.0
  %206 = vmatprep.subr.mxu0 0.0
  %207 = vmatpush1.msra.mxu0 0.0
  %208 = vmatprep.subr.mxu0 0.0
  %209 = vmatpush1.msra.mxu0 0.0
  %210 = vmatprep.subr.mxu0 0.0
  %211 = vmatpush1.msra.mxu0 0.0
  %212 = vmatprep.subr.mxu0 0.0
  %213 = vmatpush1.msra.mxu0 0.0
  %214 = vmatprep.subr.mxu0 0.0
  %215 = vmatpush1.msra.mxu0 0.0
  %216 = vmatprep.subr.mxu0 0.0
  %217 = vmatpush1.msra.mxu0 0.0
  %218 = vmatprep.subr.mxu0 0.0
  %219 = vmatpush1.msra.mxu0 0.0
  %220 = vmatprep.subr.mxu0 0.0
  %221 = vmatpush1.msra.mxu0 0.0
  %222 = vmatprep.subr.mxu0 0.0
  %223 = vmatpush1.msra.mxu0 0.0
  %224 = vmatprep.subr.mxu0 0.0
  %225 = vmatpush1.msra.mxu0 0.0
  %226 = vmatprep.subr.mxu0 0.0
  %227 = vmatpush1.msra.mxu0 0.0
  %228 = vmatprep.subr.mxu0 0.0
  %229 = vmatpush1.msra.mxu0 0.0
  %230 = vmatprep.subr.mxu0 0.0
  %231 = vmatpush1.msra.mxu0 0.0
  %232 = vmatprep.subr.mxu0 0.0
  %233 = vmatpush1.msra.mxu0 0.0
  %234 = vmatprep.subr.mxu0 0.0
  %235 = vmatpush1.msra.mxu0 0.0
  %236 = vmatprep.subr.mxu0 0.0
  %237 = vmatpush1.msra.mxu0 0.0
  %238 = vmatprep.subr.mxu0 0.0
  %239 = vmatpush1.msra.mxu0 0.0
  %240 = vmatprep.subr.mxu0 0.0
  %241 = vmatpush1.msra.mxu0 0.0
  %242 = vmatprep.subr.mxu0 0.0
  %243 = vmatpush1.msra.mxu0 0.0
  %244 = vmatprep.subr.mxu0 0.0
  %245 = vmatpush1.msra.mxu0 0.0
  %246 = vmatprep.subr.mxu0 0.0
  %247 = vmatpush1.msra.mxu0 0.0
  %248 = vmatprep.subr.mxu0 0.0
  %249 = vmatpush1.msra.mxu0 0.0
  %250 = vmatprep.subr.mxu0 0.0
  %251 = vmatpush1.msra.mxu0 0.0
  %252 = vmatprep.subr.mxu0 0.0
  %253 = vmatpush1.msra.mxu0 0.0
  %254 = vmatprep.subr.mxu0 0.0
  %255 = vmatpush1.msra.mxu0 0.0
  %256 = vmatprep.subr.mxu0 0.0
  %257 = vmatpush1.msra.mxu0 0.0
  %258 = vmatprep.subr.mxu0 0.0
  %259 = vmatpush1.msra.mxu0 0.0
  %260 = vmatprep.mubr.f32.mxu0 0.0
  %v261 = vand.u32 %v101, 4294901760
  %262 = vmatmul.mubr.f32.gmra.mrb[0].mxu0 %v261
  %v263 = vpop.f32.mrb[0].mxu0
  %v264 = vadd.f32 %v178, %v263
  %v265 = vpop.f32.mrb[0].mxu0
  %266 = vdwg.mxu0
  %267 = vmatprep.subr.mxu0 0.0
  %v268 = vand.u32 %v91, 4294901760
  %v269 = vsub.f32 %v91, %v268
  %270 = vmatpush1.msra.mxu0 %v269
  %271 = vmatprep.subr.mxu0 0.0
  %v272 = vand.u32 %v92, 4294901760
  %v273 = vsub.f32 %v92, %v272
  %274 = vmatpush1.msra.mxu0 %v273
  %275 = vmatprep.subr.mxu0 0.0
  %v276 = vand.u32 %v93, 4294901760
  %v277 = vsub.f32 %v93, %v276
  %278 = vmatpush1.msra.mxu0 %v277
  %279 = vmatprep.subr.mxu0 0.0
  %280 = vmatpush1.msra.mxu0 0.0
  %281 = vmatprep.subr.mxu0 0.0
  %282 = vmatpush1.msra.mxu0 0.0
  %283 = vmatprep.subr.mxu0 0.0
  %284 = vmatpush1.msra.mxu0 0.0
  %285 = vmatprep.subr.mxu0 0.0
  %286 = vmatpush1.msra.mxu0 0.0
  %287 = vmatprep.subr.mxu0 0.0
  %288 = vmatpush1.msra.mxu0 0.0
  %289 = vmatprep.subr.mxu0 0.0
  %290 = vmatpush1.msra.mxu0 0.0
  %291 = vmatprep.subr.mxu0 0.0
  %292 = vmatpush1.msra.mxu0 0.0
  %293 = vmatprep.subr.mxu0 0.0
  %294 = vmatpush1.msra.mxu0 0.0
  %295 = vmatprep.subr.mxu0 0.0
  %296 = vmatpush1.msra.mxu0 0.0
  %297 = vmatprep.subr.mxu0 0.0
  %298 = vmatpush1.msra.mxu0 0.0
  %299 = vmatprep.subr.mxu0 0.0
  %300 = vmatpush1.msra.mxu0 0.0
  %301 = vmatprep.subr.mxu0 0.0
  %302 = vmatpush1.msra.mxu0 0.0
  %303 = vmatprep.subr.mxu0 0.0
  %304 = vmatpush1.msra.mxu0 0.0
  %305 = vmatprep.subr.mxu0 0.0
  %306 = vmatpush1.msra.mxu0 0.0
  %307 = vmatprep.subr.mxu0 0.0
  %308 = vmatpush1.msra.mxu0 0.0
  %309 = vmatprep.subr.mxu0 0.0
  %310 = vmatpush1.msra.mxu0 0.0
  %311 = vmatprep.subr.mxu0 0.0
  %312 = vmatpush1.msra.mxu0 0.0
  %313 = vmatprep.subr.mxu0 0.0
  %314 = vmatpush1.msra.mxu0 0.0
  %315 = vmatprep.subr.mxu0 0.0
  %316 = vmatpush1.msra.mxu0 0.0
  %317 = vmatprep.subr.mxu0 0.0
  %318 = vmatpush1.msra.mxu0 0.0
  %319 = vmatprep.subr.mxu0 0.0
  %320 = vmatpush1.msra.mxu0 0.0
  %321 = vmatprep.subr.mxu0 0.0
  %322 = vmatpush1.msra.mxu0 0.0
  %323 = vmatprep.subr.mxu0 0.0
  %324 = vmatpush1.msra.mxu0 0.0
  %325 = vmatprep.subr.mxu0 0.0
  %326 = vmatpush1.msra.mxu0 0.0
  %327 = vmatprep.subr.mxu0 0.0
  %328 = vmatpush1.msra.mxu0 0.0
  %329 = vmatprep.subr.mxu0 0.0
  %330 = vmatpush1.msra.mxu0 0.0
  %331 = vmatprep.subr.mxu0 0.0
  %332 = vmatpush1.msra.mxu0 0.0
  %333 = vmatprep.subr.mxu0 0.0
  %334 = vmatpush1.msra.mxu0 0.0
  %335 = vmatprep.subr.mxu0 0.0
  %336 = vmatpush1.msra.mxu0 0.0
  %337 = vmatprep.mubr.f32.mxu0 0.0
  %v338 = vand.u32 %v101, 4294901760
  %v339 = vsub.f32 %v101, %v338
  %340 = vmatmul.mubr.f32.gmra.mrb[0].mxu0 %v339
  %v341 = vpop.f32.mrb[0].mxu0
  %v342 = vadd.f32 %v264, %v341
  %v343 = vpop.f32.mrb[0].mxu0
  %344 = vdwg.mxu0
  %345 = vmatprep.subr.mxu0 0.0
  %v346 = vand.u32 %v91, 4294901760
  %347 = vmatpush1.msra.mxu0 %v346
  %348 = vmatprep.subr.mxu0 0.0
  %v349 = vand.u32 %v92, 4294901760
  %350 = vmatpush1.msra.mxu0 %v349
  %351 = vmatprep.subr.mxu0 0.0
  %v352 = vand.u32 %v93, 4294901760
  %353 = vmatpush1.msra.mxu0 %v352
  %354 = vmatprep.subr.mxu0 0.0
  %355 = vmatpush1.msra.mxu0 0.0
  %356 = vmatprep.subr.mxu0 0.0
  %357 = vmatpush1.msra.mxu0 0.0
  %358 = vmatprep.subr.mxu0 0.0
  %359 = vmatpush1.msra.mxu0 0.0
  %360 = vmatprep.subr.mxu0 0.0
  %361 = vmatpush1.msra.mxu0 0.0
  %362 = vmatprep.subr.mxu0 0.0
  %363 = vmatpush1.msra.mxu0 0.0
  %364 = vmatprep.subr.mxu0 0.0
  %365 = vmatpush1.msra.mxu0 0.0
  %366 = vmatprep.subr.mxu0 0.0
  %367 = vmatpush1.msra.mxu0 0.0
  %368 = vmatprep.subr.mxu0 0.0
  %369 = vmatpush1.msra.mxu0 0.0
  %370 = vmatprep.subr.mxu0 0.0
  %371 = vmatpush1.msra.mxu0 0.0
  %372 = vmatprep.subr.mxu0 0.0
  %373 = vmatpush1.msra.mxu0 0.0
  %374 = vmatprep.subr.mxu0 0.0
  %375 = vmatpush1.msra.mxu0 0.0
  %376 = vmatprep.subr.mxu0 0.0
  %377 = vmatpush1.msra.mxu0 0.0
  %378 = vmatprep.subr.mxu0 0.0
  %379 = vmatpush1.msra.mxu0 0.0
  %380 = vmatprep.subr.mxu0 0.0
  %381 = vmatpush1.msra.mxu0 0.0
  %382 = vmatprep.subr.mxu0 0.0
  %383 = vmatpush1.msra.mxu0 0.0
  %384 = vmatprep.subr.mxu0 0.0
  %385 = vmatpush1.msra.mxu0 0.0
  %386 = vmatprep.subr.mxu0 0.0
  %387 = vmatpush1.msra.mxu0 0.0
  %388 = vmatprep.subr.mxu0 0.0
  %389 = vmatpush1.msra.mxu0 0.0
  %390 = vmatprep.subr.mxu0 0.0
  %391 = vmatpush1.msra.mxu0 0.0
  %392 = vmatprep.subr.mxu0 0.0
  %393 = vmatpush1.msra.mxu0 0.0
  %394 = vmatprep.subr.mxu0 0.0
  %395 = vmatpush1.msra.mxu0 0.0
  %396 = vmatprep.subr.mxu0 0.0
  %397 = vmatpush1.msra.mxu0 0.0
  %398 = vmatprep.subr.mxu0 0.0
  %399 = vmatpush1.msra.mxu0 0.0
  %400 = vmatprep.subr.mxu0 0.0
  %401 = vmatpush1.msra.mxu0 0.0
  %402 = vmatprep.subr.mxu0 0.0
  %403 = vmatpush1.msra.mxu0 0.0
  %404 = vmatprep.subr.mxu0 0.0
  %405 = vmatpush1.msra.mxu0 0.0
  %406 = vmatprep.subr.mxu0 0.0
  %407 = vmatpush1.msra.mxu0 0.0
  %408 = vmatprep.subr.mxu0 0.0
  %409 = vmatpush1.msra.mxu0 0.0
  %410 = vmatprep.subr.mxu0 0.0
  %411 = vmatpush1.msra.mxu0 0.0
  %412 = vmatprep.mubr.f32.mxu0 0.0
  %v413 = vand.u32 %v101, 4294901760
  %v414 = vsub.f32 %v101, %v413
  %v415 = vand.u32 %v414, 4294901760
  %416 = vmatmul.mubr.f32.gmra.mrb[0].mxu0 %v415
  %v417 = vpop.f32.mrb[0].mxu0
  %v418 = vadd.f32 %v342, %v417
  %v419 = vpop.f32.mrb[0].mxu0
  %420 = vdwg.mxu0
  %421 = vmatprep.subr.mxu0 0.0
  %v422 = vand.u32 %v91, 4294901760
  %v423 = vsub.f32 %v91, %v422
  %v424 = vand.u32 %v423, 4294901760
  %425 = vmatpush1.msra.mxu0 %v424
  %426 = vmatprep.subr.mxu0 0.0
  %v427 = vand.u32 %v92, 4294901760
  %v428 = vsub.f32 %v92, %v427
  %v429 = vand.u32 %v428, 4294901760
  %430 = vmatpush1.msra.mxu0 %v429
  %431 = vmatprep.subr.mxu0 0.0
  %v432 = vand.u32 %v93, 4294901760
  %v433 = vsub.f32 %v93, %v432
  %v434 = vand.u32 %v433, 4294901760
  %435 = vmatpush1.msra.mxu0 %v434
  %436 = vmatprep.subr.mxu0 0.0
  %437 = vmatpush1.msra.mxu0 0.0
  %438 = vmatprep.subr.mxu0 0.0
  %439 = vmatpush1.msra.mxu0 0.0
  %440 = vmatprep.subr.mxu0 0.0
  %441 = vmatpush1.msra.mxu0 0.0
  %442 = vmatprep.subr.mxu0 0.0
  %443 = vmatpush1.msra.mxu0 0.0
  %444 = vmatprep.subr.mxu0 0.0
  %445 = vmatpush1.msra.mxu0 0.0
  %446 = vmatprep.subr.mxu0 0.0
  %447 = vmatpush1.msra.mxu0 0.0
  %448 = vmatprep.subr.mxu0 0.0
  %449 = vmatpush1.msra.mxu0 0.0
  %450 = vmatprep.subr.mxu0 0.0
  %451 = vmatpush1.msra.mxu0 0.0
  %452 = vmatprep.subr.mxu0 0.0
  %453 = vmatpush1.msra.mxu0 0.0
  %454 = vmatprep.subr.mxu0 0.0
  %455 = vmatpush1.msra.mxu0 0.0
  %456 = vmatprep.subr.mxu0 0.0
  %457 = vmatpush1.msra.mxu0 0.0
  %458 = vmatprep.subr.mxu0 0.0
  %459 = vmatpush1.msra.mxu0 0.0
  %460 = vmatprep.subr.mxu0 0.0
  %461 = vmatpush1.msra.mxu0 0.0
  %462 = vmatprep.subr.mxu0 0.0
  %463 = vmatpush1.msra.mxu0 0.0
  %464 = vmatprep.subr.mxu0 0.0
  %465 = vmatpush1.msra.mxu0 0.0
  %466 = vmatprep.subr.mxu0 0.0
  %467 = vmatpush1.msra.mxu0 0.0
  %468 = vmatprep.subr.mxu0 0.0
  %469 = vmatpush1.msra.mxu0 0.0
  %470 = vmatprep.subr.mxu0 0.0
  %471 = vmatpush1.msra.mxu0 0.0
  %472 = vmatprep.subr.mxu0 0.0
  %473 = vmatpush1.msra.mxu0 0.0
  %474 = vmatprep.subr.mxu0 0.0
  %475 = vmatpush1.msra.mxu0 0.0
  %476 = vmatprep.subr.mxu0 0.0
  %477 = vmatpush1.msra.mxu0 0.0
  %478 = vmatprep.subr.mxu0 0.0
  %479 = vmatpush1.msra.mxu0 0.0
  %480 = vmatprep.subr.mxu0 0.0
  %481 = vmatpush1.msra.mxu0 0.0
  %482 = vmatprep.subr.mxu0 0.0
  %483 = vmatpush1.msra.mxu0 0.0
  %484 = vmatprep.subr.mxu0 0.0
  %485 = vmatpush1.msra.mxu0 0.0
  %486 = vmatprep.subr.mxu0 0.0
  %487 = vmatpush1.msra.mxu0 0.0
  %488 = vmatprep.subr.mxu0 0.0
  %489 = vmatpush1.msra.mxu0 0.0
  %490 = vmatprep.subr.mxu0 0.0
  %491 = vmatpush1.msra.mxu0 0.0
  %492 = vmatprep.subr.mxu0 0.0
  %493 = vmatpush1.msra.mxu0 0.0
  %494 = vmatprep.mubr.f32.mxu0 0.0
  %v495 = vand.u32 %v101, 4294901760
  %496 = vmatmul.mubr.f32.gmra.mrb[0].mxu0 %v495
  %v497 = vpop.f32.mrb[0].mxu0
  %v498 = vadd.f32 %v418, %v497
  %v499 = vpop.f32.mrb[0].mxu0
  %500 = vdwg.mxu0
  %501 = vmatprep.subr.mxu0 0.0
  %v502 = vand.u32 %v91, 4294901760
  %503 = vmatpush1.msra.mxu0 %v502
  %504 = vmatprep.subr.mxu0 0.0
  %v505 = vand.u32 %v92, 4294901760
  %506 = vmatpush1.msra.mxu0 %v505
  %507 = vmatprep.subr.mxu0 0.0
  %v508 = vand.u32 %v93, 4294901760
  %509 = vmatpush1.msra.mxu0 %v508
  %510 = vmatprep.subr.mxu0 0.0
  %511 = vmatpush1.msra.mxu0 0.0
  %512 = vmatprep.subr.mxu0 0.0
  %513 = vmatpush1.msra.mxu0 0.0
  %514 = vmatprep.subr.mxu0 0.0
  %515 = vmatpush1.msra.mxu0 0.0
  %516 = vmatprep.subr.mxu0 0.0
  %517 = vmatpush1.msra.mxu0 0.0
  %518 = vmatprep.subr.mxu0 0.0
  %519 = vmatpush1.msra.mxu0 0.0
  %520 = vmatprep.subr.mxu0 0.0
  %521 = vmatpush1.msra.mxu0 0.0
  %522 = vmatprep.subr.mxu0 0.0
  %523 = vmatpush1.msra.mxu0 0.0
  %524 = vmatprep.subr.mxu0 0.0
  %525 = vmatpush1.msra.mxu0 0.0
  %526 = vmatprep.subr.mxu0 0.0
  %527 = vmatpush1.msra.mxu0 0.0
  %528 = vmatprep.subr.mxu0 0.0
  %529 = vmatpush1.msra.mxu0 0.0
  %530 = vmatprep.subr.mxu0 0.0
  %531 = vmatpush1.msra.mxu0 0.0
  %532 = vmatprep.subr.mxu0 0.0
  %533 = vmatpush1.msra.mxu0 0.0
  %534 = vmatprep.subr.mxu0 0.0
  %535 = vmatpush1.msra.mxu0 0.0
  %536 = vmatprep.subr.mxu0 0.0
  %537 = vmatpush1.msra.mxu0 0.0
  %538 = vmatprep.subr.mxu0 0.0
  %539 = vmatpush1.msra.mxu0 0.0
  %540 = vmatprep.subr.mxu0 0.0
  %541 = vmatpush1.msra.mxu0 0.0
  %542 = vmatprep.subr.mxu0 0.0
  %543 = vmatpush1.msra.mxu0 0.0
  %544 = vmatprep.subr.mxu0 0.0
  %545 = vmatpush1.msra.mxu0 0.0
  %546 = vmatprep.subr.mxu0 0.0
  %547 = vmatpush1.msra.mxu0 0.0
  %548 = vmatprep.subr.mxu0 0.0
  %549 = vmatpush1.msra.mxu0 0.0
  %550 = vmatprep.subr.mxu0 0.0
  %551 = vmatpush1.msra.mxu0 0.0
  %552 = vmatprep.subr.mxu0 0.0
  %553 = vmatpush1.msra.mxu0 0.0
  %554 = vmatprep.subr.mxu0 0.0
  %555 = vmatpush1.msra.mxu0 0.0
  %556 = vmatprep.subr.mxu0 0.0
  %557 = vmatpush1.msra.mxu0 0.0
  %558 = vmatprep.subr.mxu0 0.0
  %559 = vmatpush1.msra.mxu0 0.0
  %560 = vmatprep.subr.mxu0 0.0
  %561 = vmatpush1.msra.mxu0 0.0
  %562 = vmatprep.subr.mxu0 0.0
  %563 = vmatpush1.msra.mxu0 0.0
  %564 = vmatprep.subr.mxu0 0.0
  %565 = vmatpush1.msra.mxu0 0.0
  %566 = vmatprep.subr.mxu0 0.0
  %567 = vmatpush1.msra.mxu0 0.0
  %568 = vmatprep.mubr.f32.mxu0 0.0
  %v569 = vand.u32 %v101, 4294901760
  %570 = vmatmul.mubr.f32.gmra.mrb[0].mxu0 %v569
  %v571 = vpop.f32.mrb[0].mxu0
  %v572 = vadd.f32 %v498, %v571
  %v573 = vpop.f32.mrb[0].mxu0
  %574 = vdwg.mxu0
  %v575 = vld [vmem:[%s7] sm:$0xff]
  %577 = vset.pattern.permute.xlu0 0
  %578 = vperm.xlu0 %577, %v575
  %v579 = vpop.permute.xlu0 %578
  %v581 = vmul.f32 %v572, %v579
  %v582 = vld [vmem:[%s8] sm:$0xff]
  %584 = vset.pattern.permute.xlu0 0
  %585 = vperm.xlu0 %584, %v582
  %v586 = vpop.permute.xlu0 %585
  %v588 = vadd.f32 %v581, %v586
  %vm589 = vcmp.ge.f32.partialorder %v588, 0.0
  %v590 = vmul.f32 %v588, 0.01
  %v591 = vsel %vm589, %v588, %v590
  %592 = vst [vmem:[#allocation3] sm:$0xff] %v591
  %v593 = vld [vmem:[%s5] sm:$0xff]
  %v594 = vld [vmem:[%s6] sm:$0xff]
  %v595 = vld [vmem:[#allocation3] sm:$0xff]
  %596 = vst [vmem:[#allocation5] sm:$0xff] %v595
  %598 = vrot.lane.b32.xlu0 %v595, 126
  %v599 = vpop.permute.xlu0 %598
  %vm601 = vcmask 1031168
  %602 = vst.msk [vmem:[#allocation5 + $0x8] sm:$0xff] %vm601, %v599
  %603 = vrot.lane.b32.xlu0 %v595, 124
  %v604 = vpop.permute.xlu0 %603
  %vm606 = vcmask 1014784
  %607 = vst.msk [vmem:[#allocation5 + $0x10] sm:$0xff] %vm606, %v604
  %v608 = vld [vmem:[#allocation5] sm:$0xff]
  %v609 = vld [vmem:[#allocation5 + $0x8] sm:$0xff]
  %v610 = vld [vmem:[#allocation5 + $0x10] sm:$0xff]
  %612 = vset.pattern.permute.xlu0 0
  %613 = vperm.xlu0 %612, %v594
  %v614 = vpop.permute.xlu0 %613
  %v617 = vsel %vm99, %v593, 0
  %619 = vmatprep.subr.mxu0 0.0
  %v620 = vand.u32 %v608, 4294901760
  %621 = vmatpush1.msra.mxu0 %v620
  %622 = vmatprep.subr.mxu0 0.0
  %v623 = vand.u32 %v609, 4294901760
  %624 = vmatpush1.msra.mxu0 %v623
  %625 = vmatprep.subr.mxu0 0.0
  %v626 = vand.u32 %v610, 4294901760
  %627 = vmatpush1.msra.mxu0 %v626
  %628 = vmatprep.subr.mxu0 0.0
  %629 = vmatpush1.msra.mxu0 0.0
  %630 = vmatprep.subr.mxu0 0.0
  %631 = vmatpush1.msra.mxu0 0.0
  %632 = vmatprep.subr.mxu0 0.0
  %633 = vmatpush1.msra.mxu0 0.0
  %634 = vmatprep.subr.mxu0 0.0
  %635 = vmatpush1.msra.mxu0 0.0
  %636 = vmatprep.subr.mxu0 0.0
  %637 = vmatpush1.msra.mxu0 0.0
  %638 = vmatprep.subr.mxu0 0.0
  %639 = vmatpush1.msra.mxu0 0.0
  %640 = vmatprep.subr.mxu0 0.0
  %641 = vmatpush1.msra.mxu0 0.0
  %642 = vmatprep.subr.mxu0 0.0
  %643 = vmatpush1.msra.mxu0 0.0
  %644 = vmatprep.subr.mxu0 0.0
  %645 = vmatpush1.msra.mxu0 0.0
  %646 = vmatprep.subr.mxu0 0.0
  %647 = vmatpush1.msra.mxu0 0.0
  %648 = vmatprep.subr.mxu0 0.0
  %649 = vmatpush1.msra.mxu0 0.0
  %650 = vmatprep.subr.mxu0 0.0
  %651 = vmatpush1.msra.mxu0 0.0
  %652 = vmatprep.subr.mxu0 0.0
  %653 = vmatpush1.msra.mxu0 0.0
  %654 = vmatprep.subr.mxu0 0.0
  %655 = vmatpush1.msra.mxu0 0.0
  %656 = vmatprep.subr.mxu0 0.0
  %657 = vmatpush1.msra.mxu0 0.0
  %658 = vmatprep.subr.mxu0 0.0
  %659 = vmatpush1.msra.mxu0 0.0
  %660 = vmatprep.subr.mxu0 0.0
  %661 = vmatpush1.msra.mxu0 0.0
  %662 = vmatprep.subr.mxu0 0.0
  %663 = vmatpush1.msra.mxu0 0.0
  %664 = vmatprep.subr.mxu0 0.0
  %665 = vmatpush1.msra.mxu0 0.0
  %666 = vmatprep.subr.mxu0 0.0
  %667 = vmatpush1.msra.mxu0 0.0
  %668 = vmatprep.subr.mxu0 0.0
  %669 = vmatpush1.msra.mxu0 0.0
  %670 = vmatprep.subr.mxu0 0.0
  %671 = vmatpush1.msra.mxu0 0.0
  %672 = vmatprep.subr.mxu0 0.0
  %673 = vmatpush1.msra.mxu0 0.0
  %674 = vmatprep.subr.mxu0 0.0
  %675 = vmatpush1.msra.mxu0 0.0
  %676 = vmatprep.subr.mxu0 0.0
  %677 = vmatpush1.msra.mxu0 0.0
  %678 = vmatprep.subr.mxu0 0.0
  %679 = vmatpush1.msra.mxu0 0.0
  %680 = vmatprep.subr.mxu0 0.0
  %681 = vmatpush1.msra.mxu0 0.0
  %682 = vmatprep.subr.mxu0 0.0
  %683 = vmatpush1.msra.mxu0 0.0
  %684 = vmatprep.subr.mxu0 0.0
  %685 = vmatpush1.msra.mxu0 0.0
  %686 = vmatprep.mubr.f32.mxu0 0.0
  %v687 = vand.u32 %v617, 4294901760
  %v688 = vsub.f32 %v617, %v687
  %v689 = vand.u32 %v688, 4294901760
  %v690 = vsub.f32 %v688, %v689
  %v691 = vand.u32 %v690, 4294901760
  %692 = vmatmul.mubr.f32.gmra.mrb[0].mxu0 %v691
  %v693 = vpop.f32.mrb[0].mxu0
  %v694 = vadd.f32 %v614, %v693
  %v695 = vpop.f32.mrb[0].mxu0
  %696 = vdwg.mxu0
  %697 = vmatprep.subr.mxu0 0.0
  %v698 = vand.u32 %v608, 4294901760
  %v699 = vsub.f32 %v608, %v698
  %v700 = vand.u32 %v699, 4294901760
  %v701 = vsub.f32 %v699, %v700
  %v702 = vand.u32 %v701, 4294901760
  %703 = vmatpush1.msra.mxu0 %v702
  %704 = vmatprep.subr.mxu0 0.0
  %v705 = vand.u32 %v609, 4294901760
  %v706 = vsub.f32 %v609, %v705
  %v707 = vand.u32 %v706, 4294901760
  %v708 = vsub.f32 %v706, %v707
  %v709 = vand.u32 %v708, 4294901760
  %710 = vmatpush1.msra.mxu0 %v709
  %711 = vmatprep.subr.mxu0 0.0
  %v712 = vand.u32 %v610, 4294901760
  %v713 = vsub.f32 %v610, %v712
  %v714 = vand.u32 %v713, 4294901760
  %v715 = vsub.f32 %v713, %v714
  %v716 = vand.u32 %v715, 4294901760
  %717 = vmatpush1.msra.mxu0 %v716
  %718 = vmatprep.subr.mxu0 0.0
  %719 = vmatpush1.msra.mxu0 0.0
  %720 = vmatprep.subr.mxu0 0.0
  %721 = vmatpush1.msra.mxu0 0.0
  %722 = vmatprep.subr.mxu0 0.0
  %723 = vmatpush1.msra.mxu0 0.0
  %724 = vmatprep.subr.mxu0 0.0
  %725 = vmatpush1.msra.mxu0 0.0
  %726 = vmatprep.subr.mxu0 0.0
  %727 = vmatpush1.msra.mxu0 0.0
  %728 = vmatprep.subr.mxu0 0.0
  %729 = vmatpush1.msra.mxu0 0.0
  %730 = vmatprep.subr.mxu0 0.0
  %731 = vmatpush1.msra.mxu0 0.0
  %732 = vmatprep.subr.mxu0 0.0
  %733 = vmatpush1.msra.mxu0 0.0
  %734 = vmatprep.subr.mxu0 0.0
  %735 = vmatpush1.msra.mxu0 0.0
  %736 = vmatprep.subr.mxu0 0.0
  %737 = vmatpush1.msra.mxu0 0.0
  %738 = vmatprep.subr.mxu0 0.0
  %739 = vmatpush1.msra.mxu0 0.0
  %740 = vmatprep.subr.mxu0 0.0
  %741 = vmatpush1.msra.mxu0 0.0
  %742 = vmatprep.subr.mxu0 0.0
  %743 = vmatpush1.msra.mxu0 0.0
  %744 = vmatprep.subr.mxu0 0.0
  %745 = vmatpush1.msra.mxu0 0.0
  %746 = vmatprep.subr.mxu0 0.0
  %747 = vmatpush1.msra.mxu0 0.0
  %748 = vmatprep.subr.mxu0 0.0
  %749 = vmatpush1.msra.mxu0 0.0
  %750 = vmatprep.subr.mxu0 0.0
  %751 = vmatpush1.msra.mxu0 0.0
  %752 = vmatprep.subr.mxu0 0.0
  %753 = vmatpush1.msra.mxu0 0.0
  %754 = vmatprep.subr.mxu0 0.0
  %755 = vmatpush1.msra.mxu0 0.0
  %756 = vmatprep.subr.mxu0 0.0
  %757 = vmatpush1.msra.mxu0 0.0
  %758 = vmatprep.subr.mxu0 0.0
  %759 = vmatpush1.msra.mxu0 0.0
  %760 = vmatprep.subr.mxu0 0.0
  %761 = vmatpush1.msra.mxu0 0.0
  %762 = vmatprep.subr.mxu0 0.0
  %763 = vmatpush1.msra.mxu0 0.0
  %764 = vmatprep.subr.mxu0 0.0
  %765 = vmatpush1.msra.mxu0 0.0
  %766 = vmatprep.subr.mxu0 0.0
  %767 = vmatpush1.msra.mxu0 0.0
  %768 = vmatprep.subr.mxu0 0.0
  %769 = vmatpush1.msra.mxu0 0.0
  %770 = vmatprep.subr.mxu0 0.0
  %771 = vmatpush1.msra.mxu0 0.0
  %772 = vmatprep.subr.mxu0 0.0
  %773 = vmatpush1.msra.mxu0 0.0
  %774 = vmatprep.subr.mxu0 0.0
  %775 = vmatpush1.msra.mxu0 0.0
  %776 = vmatprep.mubr.f32.mxu0 0.0
  %v777 = vand.u32 %v617, 4294901760
  %778 = vmatmul.mubr.f32.gmra.mrb[0].mxu0 %v777
  %v779 = vpop.f32.mrb[0].mxu0
  %v780 = vadd.f32 %v694, %v779
  %v781 = vpop.f32.mrb[0].mxu0
  %782 = vdwg.mxu0
  %783 = vmatprep.subr.mxu0 0.0
  %v784 = vand.u32 %v608, 4294901760
  %v785 = vsub.f32 %v608, %v784
  %786 = vmatpush1.msra.mxu0 %v785
  %787 = vmatprep.subr.mxu0 0.0
  %v788 = vand.u32 %v609, 4294901760
  %v789 = vsub.f32 %v609, %v788
  %790 = vmatpush1.msra.mxu0 %v789
  %791 = vmatprep.subr.mxu0 0.0
  %v792 = vand.u32 %v610, 4294901760
  %v793 = vsub.f32 %v610, %v792
  %794 = vmatpush1.msra.mxu0 %v793
  %795 = vmatprep.subr.mxu0 0.0
  %796 = vmatpush1.msra.mxu0 0.0
  %797 = vmatprep.subr.mxu0 0.0
  %798 = vmatpush1.msra.mxu0 0.0
  %799 = vmatprep.subr.mxu0 0.0
  %800 = vmatpush1.msra.mxu0 0.0
  %801 = vmatprep.subr.mxu0 0.0
  %802 = vmatpush1.msra.mxu0 0.0
  %803 = vmatprep.subr.mxu0 0.0
  %804 = vmatpush1.msra.mxu0 0.0
  %805 = vmatprep.subr.mxu0 0.0
  %806 = vmatpush1.msra.mxu0 0.0
  %807 = vmatprep.subr.mxu0 0.0
  %808 = vmatpush1.msra.mxu0 0.0
  %809 = vmatprep.subr.mxu0 0.0
  %810 = vmatpush1.msra.mxu0 0.0
  %811 = vmatprep.subr.mxu0 0.0
  %812 = vmatpush1.msra.mxu0 0.0
  %813 = vmatprep.subr.mxu0 0.0
  %814 = vmatpush1.msra.mxu0 0.0
  %815 = vmatprep.subr.mxu0 0.0
  %816 = vmatpush1.msra.mxu0 0.0
  %817 = vmatprep.subr.mxu0 0.0
  %818 = vmatpush1.msra.mxu0 0.0
  %819 = vmatprep.subr.mxu0 0.0
  %820 = vmatpush1.msra.mxu0 0.0
  %821 = vmatprep.subr.mxu0 0.0
  %822 = vmatpush1.msra.mxu0 0.0
  %823 = vmatprep.subr.mxu0 0.0
  %824 = vmatpush1.msra.mxu0 0.0
  %825 = vmatprep.subr.mxu0 0.0
  %826 = vmatpush1.msra.mxu0 0.0
  %827 = vmatprep.subr.mxu0 0.0
  %828 = vmatpush1.msra.mxu0 0.0
  %829 = vmatprep.subr.mxu0 0.0
  %830 = vmatpush1.msra.mxu0 0.0
  %831 = vmatprep.subr.mxu0 0.0
  %832 = vmatpush1.msra.mxu0 0.0
  %833 = vmatprep.subr.mxu0 0.0
  %834 = vmatpush1.msra.mxu0 0.0
  %835 = vmatprep.subr.mxu0 0.0
  %836 = vmatpush1.msra.mxu0 0.0
  %837 = vmatprep.subr.mxu0 0.0
  %838 = vmatpush1.msra.mxu0 0.0
  %839 = vmatprep.subr.mxu0 0.0
  %840 = vmatpush1.msra.mxu0 0.0
  %841 = vmatprep.subr.mxu0 0.0
  %842 = vmatpush1.msra.mxu0 0.0
  %843 = vmatprep.subr.mxu0 0.0
  %844 = vmatpush1.msra.mxu0 0.0
  %845 = vmatprep.subr.mxu0 0.0
  %846 = vmatpush1.msra.mxu0 0.0
  %847 = vmatprep.subr.mxu0 0.0
  %848 = vmatpush1.msra.mxu0 0.0
  %849 = vmatprep.subr.mxu0 0.0
  %850 = vmatpush1.msra.mxu0 0.0
  %851 = vmatprep.subr.mxu0 0.0
  %852 = vmatpush1.msra.mxu0 0.0
  %853 = vmatprep.mubr.f32.mxu0 0.0
  %v854 = vand.u32 %v617, 4294901760
  %v855 = vsub.f32 %v617, %v854
  %856 = vmatmul.mubr.f32.gmra.mrb[0].mxu0 %v855
  %v857 = vpop.f32.mrb[0].mxu0
  %v858 = vadd.f32 %v780, %v857
  %v859 = vpop.f32.mrb[0].mxu0
  %860 = vdwg.mxu0
  %861 = vmatprep.subr.mxu0 0.0
  %v862 = vand.u32 %v608, 4294901760
  %863 = vmatpush1.msra.mxu0 %v862
  %864 = vmatprep.subr.mxu0 0.0
  %v865 = vand.u32 %v609, 4294901760
  %866 = vmatpush1.msra.mxu0 %v865
  %867 = vmatprep.subr.mxu0 0.0
  %v868 = vand.u32 %v610, 4294901760
  %869 = vmatpush1.msra.mxu0 %v868
  %870 = vmatprep.subr.mxu0 0.0
  %871 = vmatpush1.msra.mxu0 0.0
  %872 = vmatprep.subr.mxu0 0.0
  %873 = vmatpush1.msra.mxu0 0.0
  %874 = vmatprep.subr.mxu0 0.0
  %875 = vmatpush1.msra.mxu0 0.0
  %876 = vmatprep.subr.mxu0 0.0
  %877 = vmatpush1.msra.mxu0 0.0
  %878 = vmatprep.subr.mxu0 0.0
  %879 = vmatpush1.msra.mxu0 0.0
  %880 = vmatprep.subr.mxu0 0.0
  %881 = vmatpush1.msra.mxu0 0.0
  %882 = vmatprep.subr.mxu0 0.0
  %883 = vmatpush1.msra.mxu0 0.0
  %884 = vmatprep.subr.mxu0 0.0
  %885 = vmatpush1.msra.mxu0 0.0
  %886 = vmatprep.subr.mxu0 0.0
  %887 = vmatpush1.msra.mxu0 0.0
  %888 = vmatprep.subr.mxu0 0.0
  %889 = vmatpush1.msra.mxu0 0.0
  %890 = vmatprep.subr.mxu0 0.0
  %891 = vmatpush1.msra.mxu0 0.0
  %892 = vmatprep.subr.mxu0 0.0
  %893 = vmatpush1.msra.mxu0 0.0
  %894 = vmatprep.subr.mxu0 0.0
  %895 = vmatpush1.msra.mxu0 0.0
  %896 = vmatprep.subr.mxu0 0.0
  %897 = vmatpush1.msra.mxu0 0.0
  %898 = vmatprep.subr.mxu0 0.0
  %899 = vmatpush1.msra.mxu0 0.0
  %900 = vmatprep.subr.mxu0 0.0
  %901 = vmatpush1.msra.mxu0 0.0
  %902 = vmatprep.subr.mxu0 0.0
  %903 = vmatpush1.msra.mxu0 0.0
  %904 = vmatprep.subr.mxu0 0.0
  %905 = vmatpush1.msra.mxu0 0.0
  %906 = vmatprep.subr.mxu0 0.0
  %907 = vmatpush1.msra.mxu0 0.0
  %908 = vmatprep.subr.mxu0 0.0
  %909 = vmatpush1.msra.mxu0 0.0
  %910 = vmatprep.subr.mxu0 0.0
  %911 = vmatpush1.msra.mxu0 0.0
  %912 = vmatprep.subr.mxu0 0.0
  %913 = vmatpush1.msra.mxu0 0.0
  %914 = vmatprep.subr.mxu0 0.0
  %915 = vmatpush1.msra.mxu0 0.0
  %916 = vmatprep.subr.mxu0 0.0
  %917 = vmatpush1.msra.mxu0 0.0
  %918 = vmatprep.subr.mxu0 0.0
  %919 = vmatpush1.msra.mxu0 0.0
  %920 = vmatprep.subr.mxu0 0.0
  %921 = vmatpush1.msra.mxu0 0.0
  %922 = vmatprep.subr.mxu0 0.0
  %923 = vmatpush1.msra.mxu0 0.0
  %924 = vmatprep.subr.mxu0 0.0
  %925 = vmatpush1.msra.mxu0 0.0
  %926 = vmatprep.subr.mxu0 0.0
  %927 = vmatpush1.msra.mxu0 0.0
  %928 = vmatprep.mubr.f32.mxu0 0.0
  %v929 = vand.u32 %v617, 4294901760
  %v930 = vsub.f32 %v617, %v929
  %v931 = vand.u32 %v930, 4294901760
  %932 = vmatmul.mubr.f32.gmra.mrb[0].mxu0 %v931
  %v933 = vpop.f32.mrb[0].mxu0
  %v934 = vadd.f32 %v858, %v933
  %v935 = vpop.f32.mrb[0].mxu0
  %936 = vdwg.mxu0
  %937 = vmatprep.subr.mxu0 0.0
  %v938 = vand.u32 %v608, 4294901760
  %v939 = vsub.f32 %v608, %v938
  %v940 = vand.u32 %v939, 4294901760
  %941 = vmatpush1.msra.mxu0 %v940
  %942 = vmatprep.subr.mxu0 0.0
  %v943 = vand.u32 %v609, 4294901760
  %v944 = vsub.f32 %v609, %v943
  %v945 = vand.u32 %v944, 4294901760
  %946 = vmatpush1.msra.mxu0 %v945
  %947 = vmatprep.subr.mxu0 0.0
  %v948 = vand.u32 %v610, 4294901760
  %v949 = vsub.f32 %v610, %v948
  %v950 = vand.u32 %v949, 4294901760
  %951 = vmatpush1.msra.mxu0 %v950
  %952 = vmatprep.subr.mxu0 0.0
  %953 = vmatpush1.msra.mxu0 0.0
  %954 = vmatprep.subr.mxu0 0.0
  %955 = vmatpush1.msra.mxu0 0.0
  %956 = vmatprep.subr.mxu0 0.0
  %957 = vmatpush1.msra.mxu0 0.0
  %958 = vmatprep.subr.mxu0 0.0
  %959 = vmatpush1.msra.mxu0 0.0
  %960 = vmatprep.subr.mxu0 0.0
  %961 = vmatpush1.msra.mxu0 0.0
  %962 = vmatprep.subr.mxu0 0.0
  %963 = vmatpush1.msra.mxu0 0.0
  %964 = vmatprep.subr.mxu0 0.0
  %965 = vmatpush1.msra.mxu0 0.0
  %966 = vmatprep.subr.mxu0 0.0
  %967 = vmatpush1.msra.mxu0 0.0
  %968 = vmatprep.subr.mxu0 0.0
  %969 = vmatpush1.msra.mxu0 0.0
  %970 = vmatprep.subr.mxu0 0.0
  %971 = vmatpush1.msra.mxu0 0.0
  %972 = vmatprep.subr.mxu0 0.0
  %973 = vmatpush1.msra.mxu0 0.0
  %974 = vmatprep.subr.mxu0 0.0
  %975 = vmatpush1.msra.mxu0 0.0
  %976 = vmatprep.subr.mxu0 0.0
  %977 = vmatpush1.msra.mxu0 0.0
  %978 = vmatprep.subr.mxu0 0.0
  %979 = vmatpush1.msra.mxu0 0.0
  %980 = vmatprep.subr.mxu0 0.0
  %981 = vmatpush1.msra.mxu0 0.0
  %982 = vmatprep.subr.mxu0 0.0
  %983 = vmatpush1.msra.mxu0 0.0
  %984 = vmatprep.subr.mxu0 0.0
  %985 = vmatpush1.msra.mxu0 0.0
  %986 = vmatprep.subr.mxu0 0.0
  %987 = vmatpush1.msra.mxu0 0.0
  %988 = vmatprep.subr.mxu0 0.0
  %989 = vmatpush1.msra.mxu0 0.0
  %990 = vmatprep.subr.mxu0 0.0
  %991 = vmatpush1.msra.mxu0 0.0
  %992 = vmatprep.subr.mxu0 0.0
  %993 = vmatpush1.msra.mxu0 0.0
  %994 = vmatprep.subr.mxu0 0.0
  %995 = vmatpush1.msra.mxu0 0.0
  %996 = vmatprep.subr.mxu0 0.0
  %997 = vmatpush1.msra.mxu0 0.0
  %998 = vmatprep.subr.mxu0 0.0
  %999 = vmatpush1.msra.mxu0 0.0
  %1000 = vmatprep.subr.mxu0 0.0
  %1001 = vmatpush1.msra.mxu0 0.0
  %1002 = vmatprep.subr.mxu0 0.0
  %1003 = vmatpush1.msra.mxu0 0.0
  %1004 = vmatprep.subr.mxu0 0.0
  %1005 = vmatpush1.msra.mxu0 0.0
  %1006 = vmatprep.subr.mxu0 0.0
  %1007 = vmatpush1.msra.mxu0 0.0
  %1008 = vmatprep.subr.mxu0 0.0
  %1009 = vmatpush1.msra.mxu0 0.0
  %1010 = vmatprep.mubr.f32.mxu0 0.0
  %v1011 = vand.u32 %v617, 4294901760
  %1012 = vmatmul.mubr.f32.gmra.mrb[0].mxu0 %v1011
  %v1013 = vpop.f32.mrb[0].mxu0
  %v1014 = vadd.f32 %v934, %v1013
  %v1015 = vpop.f32.mrb[0].mxu0
  %1016 = vdwg.mxu0
  %1017 = vmatprep.subr.mxu0 0.0
  %v1018 = vand.u32 %v608, 4294901760
  %1019 = vmatpush1.msra.mxu0 %v1018
  %1020 = vmatprep.subr.mxu0 0.0
  %v1021 = vand.u32 %v609, 4294901760
  %1022 = vmatpush1.msra.mxu0 %v1021
  %1023 = vmatprep.subr.mxu0 0.0
  %v1024 = vand.u32 %v610, 4294901760
  %1025 = vmatpush1.msra.mxu0 %v1024
  %1026 = vmatprep.subr.mxu0 0.0
  %1027 = vmatpush1.msra.mxu0 0.0
  %1028 = vmatprep.subr.mxu0 0.0
  %1029 = vmatpush1.msra.mxu0 0.0
  %1030 = vmatprep.subr.mxu0 0.0
  %1031 = vmatpush1.msra.mxu0 0.0
  %1032 = vmatprep.subr.mxu0 0.0
  %1033 = vmatpush1.msra.mxu0 0.0
  %1034 = vmatprep.subr.mxu0 0.0
  %1035 = vmatpush1.msra.mxu0 0.0
  %1036 = vmatprep.subr.mxu0 0.0
  %1037 = vmatpush1.msra.mxu0 0.0
  %1038 = vmatprep.subr.mxu0 0.0
  %1039 = vmatpush1.msra.mxu0 0.0
  %1040 = vmatprep.subr.mxu0 0.0
  %1041 = vmatpush1.msra.mxu0 0.0
  %1042 = vmatprep.subr.mxu0 0.0
  %1043 = vmatpush1.msra.mxu0 0.0
  %1044 = vmatprep.subr.mxu0 0.0
  %1045 = vmatpush1.msra.mxu0 0.0
  %1046 = vmatprep.subr.mxu0 0.0
  %1047 = vmatpush1.msra.mxu0 0.0
  %1048 = vmatprep.subr.mxu0 0.0
  %1049 = vmatpush1.msra.mxu0 0.0
  %1050 = vmatprep.subr.mxu0 0.0
  %1051 = vmatpush1.msra.mxu0 0.0
  %1052 = vmatprep.subr.mxu0 0.0
  %1053 = vmatpush1.msra.mxu0 0.0
  %1054 = vmatprep.subr.mxu0 0.0
  %1055 = vmatpush1.msra.mxu0 0.0
  %1056 = vmatprep.subr.mxu0 0.0
  %1057 = vmatpush1.msra.mxu0 0.0
  %1058 = vmatprep.subr.mxu0 0.0
  %1059 = vmatpush1.msra.mxu0 0.0
  %1060 = vmatprep.subr.mxu0 0.0
  %1061 = vmatpush1.msra.mxu0 0.0
  %1062 = vmatprep.subr.mxu0 0.0
  %1063 = vmatpush1.msra.mxu0 0.0
  %1064 = vmatprep.subr.mxu0 0.0
  %1065 = vmatpush1.msra.mxu0 0.0
  %1066 = vmatprep.subr.mxu0 0.0
  %1067 = vmatpush1.msra.mxu0 0.0
  %1068 = vmatprep.subr.mxu0 0.0
  %1069 = vmatpush1.msra.mxu0 0.0
  %1070 = vmatprep.subr.mxu0 0.0
  %1071 = vmatpush1.msra.mxu0 0.0
  %1072 = vmatprep.subr.mxu0 0.0
  %1073 = vmatpush1.msra.mxu0 0.0
  %1074 = vmatprep.subr.mxu0 0.0
  %1075 = vmatpush1.msra.mxu0 0.0
  %1076 = vmatprep.subr.mxu0 0.0
  %1077 = vmatpush1.msra.mxu0 0.0
  %1078 = vmatprep.subr.mxu0 0.0
  %1079 = vmatpush1.msra.mxu0 0.0
  %1080 = vmatprep.subr.mxu0 0.0
  %1081 = vmatpush1.msra.mxu0 0.0
  %1082 = vmatprep.subr.mxu0 0.0
  %1083 = vmatpush1.msra.mxu0 0.0
  %1084 = vmatprep.mubr.f32.mxu0 0.0
  %v1085 = vand.u32 %v617, 4294901760
  %1086 = vmatmul.mubr.f32.gmra.mrb[0].mxu0 %v1085
  %v1087 = vpop.f32.mrb[0].mxu0
  %v1088 = vadd.f32 %v1014, %v1087
  %v1089 = vpop.f32.mrb[0].mxu0
  %1090 = vdwg.mxu0
  %v1091 = vld [vmem:[%s11] sm:$0xff]
  %1093 = vset.pattern.permute.xlu0 0
  %1094 = vperm.xlu0 %1093, %v1091
  %v1095 = vpop.permute.xlu0 %1094
  %v1097 = vmul.f32 %v1088, %v1095
  %v1098 = vld [vmem:[%s12] sm:$0xff]
  %1100 = vset.pattern.permute.xlu0 0
  %1101 = vperm.xlu0 %1100, %v1098
  %v1102 = vpop.permute.xlu0 %1101
  %v1104 = vadd.f32 %v1097, %v1102
  %vm1105 = vcmp.ge.f32.partialorder %v1104, 0.0
  %v1106 = vmul.f32 %v1104, 0.01
  %v1107 = vsel %vm1105, %v1104, %v1106
  %1108 = vst [vmem:[#allocation4] sm:$0xff] %v1107
  %v1109 = vld [vmem:[%s9] sm:$0x3f]
  %v1110 = vld [vmem:[%s10] sm:$0x3f]
  %v1111 = vld [vmem:[#allocation4] sm:$0xff]
  %1112 = vst [vmem:[#allocation5] sm:$0xff] %v1111
  %1114 = vrot.lane.b32.xlu0 %v1111, 124
  %v1115 = vpop.permute.xlu0 %1114
  %1117 = vst.msk [vmem:[#allocation5 + $0x8] sm:$0xff] %vm606, %v1115
  %1118 = vrot.lane.b32.xlu0 %v1111, 120
  %v1119 = vpop.permute.xlu0 %1118
  %vm1121 = vcmask 982016
  %1122 = vst.msk [vmem:[#allocation5 + $0x10] sm:$0xff] %vm1121, %v1119
  %v1123 = vld [vmem:[#allocation5] sm:$0xff]
  %v1124 = vld [vmem:[#allocation5 + $0x8] sm:$0xff]
  %v1125 = vld [vmem:[#allocation5 + $0x10] sm:$0xff]
  %1127 = vset.pattern.permute.xlu0 0
  %1128 = vperm.xlu0 %1127, %v1110
  %v1129 = vpop.permute.xlu0 %1128
  %v1132 = vsel %vm99, %v1109, 0
  %1134 = vmatprep.subr.mxu0 0.0
  %v1135 = vand.u32 %v1123, 4294901760
  %1136 = vmatpush1.msra.mxu0 %v1135
  %1137 = vmatprep.subr.mxu0 0.0
  %v1138 = vand.u32 %v1124, 4294901760
  %1139 = vmatpush1.msra.mxu0 %v1138
  %1140 = vmatprep.subr.mxu0 0.0
  %v1141 = vand.u32 %v1125, 4294901760
  %1142 = vmatpush1.msra.mxu0 %v1141
  %1143 = vmatprep.subr.mxu0 0.0
  %1144 = vmatpush1.msra.mxu0 0.0
  %1145 = vmatprep.subr.mxu0 0.0
  %1146 = vmatpush1.msra.mxu0 0.0
  %1147 = vmatprep.subr.mxu0 0.0
  %1148 = vmatpush1.msra.mxu0 0.0
  %1149 = vmatprep.subr.mxu0 0.0
  %1150 = vmatpush1.msra.mxu0 0.0
  %1151 = vmatprep.subr.mxu0 0.0
  %1152 = vmatpush1.msra.mxu0 0.0
  %1153 = vmatprep.subr.mxu0 0.0
  %1154 = vmatpush1.msra.mxu0 0.0
  %1155 = vmatprep.subr.mxu0 0.0
  %1156 = vmatpush1.msra.mxu0 0.0
  %1157 = vmatprep.subr.mxu0 0.0
  %1158 = vmatpush1.msra.mxu0 0.0
  %1159 = vmatprep.subr.mxu0 0.0
  %1160 = vmatpush1.msra.mxu0 0.0
  %1161 = vmatprep.subr.mxu0 0.0
  %1162 = vmatpush1.msra.mxu0 0.0
  %1163 = vmatprep.subr.mxu0 0.0
  %1164 = vmatpush1.msra.mxu0 0.0
  %1165 = vmatprep.subr.mxu0 0.0
  %1166 = vmatpush1.msra.mxu0 0.0
  %1167 = vmatprep.subr.mxu0 0.0
  %1168 = vmatpush1.msra.mxu0 0.0
  %1169 = vmatprep.subr.mxu0 0.0
  %1170 = vmatpush1.msra.mxu0 0.0
  %1171 = vmatprep.subr.mxu0 0.0
  %1172 = vmatpush1.msra.mxu0 0.0
  %1173 = vmatprep.subr.mxu0 0.0
  %1174 = vmatpush1.msra.mxu0 0.0
  %1175 = vmatprep.subr.mxu0 0.0
  %1176 = vmatpush1.msra.mxu0 0.0
  %1177 = vmatprep.subr.mxu0 0.0
  %1178 = vmatpush1.msra.mxu0 0.0
  %1179 = vmatprep.subr.mxu0 0.0
  %1180 = vmatpush1.msra.mxu0 0.0
  %1181 = vmatprep.subr.mxu0 0.0
  %1182 = vmatpush1.msra.mxu0 0.0
  %1183 = vmatprep.subr.mxu0 0.0
  %1184 = vmatpush1.msra.mxu0 0.0
  %1185 = vmatprep.subr.mxu0 0.0
  %1186 = vmatpush1.msra.mxu0 0.0
  %1187 = vmatprep.subr.mxu0 0.0
  %1188 = vmatpush1.msra.mxu0 0.0
  %1189 = vmatprep.subr.mxu0 0.0
  %1190 = vmatpush1.msra.mxu0 0.0
  %1191 = vmatprep.subr.mxu0 0.0
  %1192 = vmatpush1.msra.mxu0 0.0
  %1193 = vmatprep.subr.mxu0 0.0
  %1194 = vmatpush1.msra.mxu0 0.0
  %1195 = vmatprep.subr.mxu0 0.0
  %1196 = vmatpush1.msra.mxu0 0.0
  %1197 = vmatprep.subr.mxu0 0.0
  %1198 = vmatpush1.msra.mxu0 0.0
  %1199 = vmatprep.subr.mxu0 0.0
  %1200 = vmatpush1.msra.mxu0 0.0
  %1201 = vmatprep.mubr.f32.mxu0 0.0
  %v1202 = vand.u32 %v1132, 4294901760
  %v1203 = vsub.f32 %v1132, %v1202
  %v1204 = vand.u32 %v1203, 4294901760
  %v1205 = vsub.f32 %v1203, %v1204
  %v1206 = vand.u32 %v1205, 4294901760
  %1207 = vmatmul.mubr.f32.gmra.mrb[0].mxu0 %v1206
  %v1208 = vpop.f32.mrb[0].mxu0
  %v1209 = vadd.f32 %v1129, %v1208
  %v1210 = vpop.f32.mrb[0].mxu0
  %1211 = vdwg.mxu0
  %1212 = vmatprep.subr.mxu0 0.0
  %v1213 = vand.u32 %v1123, 4294901760
  %v1214 = vsub.f32 %v1123, %v1213
  %v1215 = vand.u32 %v1214, 4294901760
  %v1216 = vsub.f32 %v1214, %v1215
  %v1217 = vand.u32 %v1216, 4294901760
  %1218 = vmatpush1.msra.mxu0 %v1217
  %1219 = vmatprep.subr.mxu0 0.0
  %v1220 = vand.u32 %v1124, 4294901760
  %v1221 = vsub.f32 %v1124, %v1220
  %v1222 = vand.u32 %v1221, 4294901760
  %v1223 = vsub.f32 %v1221, %v1222
  %v1224 = vand.u32 %v1223, 4294901760
  %1225 = vmatpush1.msra.mxu0 %v1224
  %1226 = vmatprep.subr.mxu0 0.0
  %v1227 = vand.u32 %v1125, 4294901760
  %v1228 = vsub.f32 %v1125, %v1227
  %v1229 = vand.u32 %v1228, 4294901760
  %v1230 = vsub.f32 %v1228, %v1229
  %v1231 = vand.u32 %v1230, 4294901760
  %1232 = vmatpush1.msra.mxu0 %v1231
  %1233 = vmatprep.subr.mxu0 0.0
  %1234 = vmatpush1.msra.mxu0 0.0
  %1235 = vmatprep.subr.mxu0 0.0
  %1236 = vmatpush1.msra.mxu0 0.0
  %1237 = vmatprep.subr.mxu0 0.0
  %1238 = vmatpush1.msra.mxu0 0.0
  %1239 = vmatprep.subr.mxu0 0.0
  %1240 = vmatpush1.msra.mxu0 0.0
  %1241 = vmatprep.subr.mxu0 0.0
  %1242 = vmatpush1.msra.mxu0 0.0
  %1243 = vmatprep.subr.mxu0 0.0
  %1244 = vmatpush1.msra.mxu0 0.0
  %1245 = vmatprep.subr.mxu0 0.0
  %1246 = vmatpush1.msra.mxu0 0.0
  %1247 = vmatprep.subr.mxu0 0.0
  %1248 = vmatpush1.msra.mxu0 0.0
  %1249 = vmatprep.subr.mxu0 0.0
  %1250 = vmatpush1.msra.mxu0 0.0
  %1251 = vmatprep.subr.mxu0 0.0
  %1252 = vmatpush1.msra.mxu0 0.0
  %1253 = vmatprep.subr.mxu0 0.0
  %1254 = vmatpush1.msra.mxu0 0.0
  %1255 = vmatprep.subr.mxu0 0.0
  %1256 = vmatpush1.msra.mxu0 0.0
  %1257 = vmatprep.subr.mxu0 0.0
  %1258 = vmatpush1.msra.mxu0 0.0
  %1259 = vmatprep.subr.mxu0 0.0
  %1260 = vmatpush1.msra.mxu0 0.0
  %1261 = vmatprep.subr.mxu0 0.0
  %1262 = vmatpush1.msra.mxu0 0.0
  %1263 = vmatprep.subr.mxu0 0.0
  %1264 = vmatpush1.msra.mxu0 0.0
  %1265 = vmatprep.subr.mxu0 0.0
  %1266 = vmatpush1.msra.mxu0 0.0
  %1267 = vmatprep.subr.mxu0 0.0
  %1268 = vmatpush1.msra.mxu0 0.0
  %1269 = vmatprep.subr.mxu0 0.0
  %1270 = vmatpush1.msra.mxu0 0.0
  %1271 = vmatprep.subr.mxu0 0.0
  %1272 = vmatpush1.msra.mxu0 0.0
  %1273 = vmatprep.subr.mxu0 0.0
  %1274 = vmatpush1.msra.mxu0 0.0
  %1275 = vmatprep.subr.mxu0 0.0
  %1276 = vmatpush1.msra.mxu0 0.0
  %1277 = vmatprep.subr.mxu0 0.0
  %1278 = vmatpush1.msra.mxu0 0.0
  %1279 = vmatprep.subr.mxu0 0.0
  %1280 = vmatpush1.msra.mxu0 0.0
  %1281 = vmatprep.subr.mxu0 0.0
  %1282 = vmatpush1.msra.mxu0 0.0
  %1283 = vmatprep.subr.mxu0 0.0
  %1284 = vmatpush1.msra.mxu0 0.0
  %1285 = vmatprep.subr.mxu0 0.0
  %1286 = vmatpush1.msra.mxu0 0.0
  %1287 = vmatprep.subr.mxu0 0.0
  %1288 = vmatpush1.msra.mxu0 0.0
  %1289 = vmatprep.subr.mxu0 0.0
  %1290 = vmatpush1.msra.mxu0 0.0
  %1291 = vmatprep.mubr.f32.mxu0 0.0
  %v1292 = vand.u32 %v1132, 4294901760
  %1293 = vmatmul.mubr.f32.gmra.mrb[0].mxu0 %v1292
  %v1294 = vpop.f32.mrb[0].mxu0
  %v1295 = vadd.f32 %v1209, %v1294
  %v1296 = vpop.f32.mrb[0].mxu0
  %1297 = vdwg.mxu0
  %1298 = vmatprep.subr.mxu0 0.0
  %v1299 = vand.u32 %v1123, 4294901760
  %v1300 = vsub.f32 %v1123, %v1299
  %1301 = vmatpush1.msra.mxu0 %v1300
  %1302 = vmatprep.subr.mxu0 0.0
  %v1303 = vand.u32 %v1124, 4294901760
  %v1304 = vsub.f32 %v1124, %v1303
  %1305 = vmatpush1.msra.mxu0 %v1304
  %1306 = vmatprep.subr.mxu0 0.0
  %v1307 = vand.u32 %v1125, 4294901760
  %v1308 = vsub.f32 %v1125, %v1307
  %1309 = vmatpush1.msra.mxu0 %v1308
  %1310 = vmatprep.subr.mxu0 0.0
  %1311 = vmatpush1.msra.mxu0 0.0
  %1312 = vmatprep.subr.mxu0 0.0
  %1313 = vmatpush1.msra.mxu0 0.0
  %1314 = vmatprep.subr.mxu0 0.0
  %1315 = vmatpush1.msra.mxu0 0.0
  %1316 = vmatprep.subr.mxu0 0.0
  %1317 = vmatpush1.msra.mxu0 0.0
  %1318 = vmatprep.subr.mxu0 0.0
  %1319 = vmatpush1.msra.mxu0 0.0
  %1320 = vmatprep.subr.mxu0 0.0
  %1321 = vmatpush1.msra.mxu0 0.0
  %1322 = vmatprep.subr.mxu0 0.0
  %1323 = vmatpush1.msra.mxu0 0.0
  %1324 = vmatprep.subr.mxu0 0.0
  %1325 = vmatpush1.msra.mxu0 0.0
  %1326 = vmatprep.subr.mxu0 0.0
  %1327 = vmatpush1.msra.mxu0 0.0
  %1328 = vmatprep.subr.mxu0 0.0
  %1329 = vmatpush1.msra.mxu0 0.0
  %1330 = vmatprep.subr.mxu0 0.0
  %1331 = vmatpush1.msra.mxu0 0.0
  %1332 = vmatprep.subr.mxu0 0.0
  %1333 = vmatpush1.msra.mxu0 0.0
  %1334 = vmatprep.subr.mxu0 0.0
  %1335 = vmatpush1.msra.mxu0 0.0
  %1336 = vmatprep.subr.mxu0 0.0
  %1337 = vmatpush1.msra.mxu0 0.0
  %1338 = vmatprep.subr.mxu0 0.0
  %1339 = vmatpush1.msra.mxu0 0.0
  %1340 = vmatprep.subr.mxu0 0.0
  %1341 = vmatpush1.msra.mxu0 0.0
  %1342 = vmatprep.subr.mxu0 0.0
  %1343 = vmatpush1.msra.mxu0 0.0
  %1344 = vmatprep.subr.mxu0 0.0
  %1345 = vmatpush1.msra.mxu0 0.0
  %1346 = vmatprep.subr.mxu0 0.0
  %1347 = vmatpush1.msra.mxu0 0.0
  %1348 = vmatprep.subr.mxu0 0.0
  %1349 = vmatpush1.msra.mxu0 0.0
  %1350 = vmatprep.subr.mxu0 0.0
  %1351 = vmatpush1.msra.mxu0 0.0
  %1352 = vmatprep.subr.mxu0 0.0
  %1353 = vmatpush1.msra.mxu0 0.0
  %1354 = vmatprep.subr.mxu0 0.0
  %1355 = vmatpush1.msra.mxu0 0.0
  %1356 = vmatprep.subr.mxu0 0.0
  %1357 = vmatpush1.msra.mxu0 0.0
  %1358 = vmatprep.subr.mxu0 0.0
  %1359 = vmatpush1.msra.mxu0 0.0
  %1360 = vmatprep.subr.mxu0 0.0
  %1361 = vmatpush1.msra.mxu0 0.0
  %1362 = vmatprep.subr.mxu0 0.0
  %1363 = vmatpush1.msra.mxu0 0.0
  %1364 = vmatprep.subr.mxu0 0.0
  %1365 = vmatpush1.msra.mxu0 0.0
  %1366 = vmatprep.subr.mxu0 0.0
  %1367 = vmatpush1.msra.mxu0 0.0
  %1368 = vmatprep.mubr.f32.mxu0 0.0
  %v1369 = vand.u32 %v1132, 4294901760
  %v1370 = vsub.f32 %v1132, %v1369
  %1371 = vmatmul.mubr.f32.gmra.mrb[0].mxu0 %v1370
  %v1372 = vpop.f32.mrb[0].mxu0
  %v1373 = vadd.f32 %v1295, %v1372
  %v1374 = vpop.f32.mrb[0].mxu0
  %1375 = vdwg.mxu0
  %1376 = vmatprep.subr.mxu0 0.0
  %v1377 = vand.u32 %v1123, 4294901760
  %1378 = vmatpush1.msra.mxu0 %v1377
  %1379 = vmatprep.subr.mxu0 0.0
  %v1380 = vand.u32 %v1124, 4294901760
  %1381 = vmatpush1.msra.mxu0 %v1380
  %1382 = vmatprep.subr.mxu0 0.0
  %v1383 = vand.u32 %v1125, 4294901760
  %1384 = vmatpush1.msra.mxu0 %v1383
  %1385 = vmatprep.subr.mxu0 0.0
  %1386 = vmatpush1.msra.mxu0 0.0
  %1387 = vmatprep.subr.mxu0 0.0
  %1388 = vmatpush1.msra.mxu0 0.0
  %1389 = vmatprep.subr.mxu0 0.0
  %1390 = vmatpush1.msra.mxu0 0.0
  %1391 = vmatprep.subr.mxu0 0.0
  %1392 = vmatpush1.msra.mxu0 0.0
  %1393 = vmatprep.subr.mxu0 0.0
  %1394 = vmatpush1.msra.mxu0 0.0
  %1395 = vmatprep.subr.mxu0 0.0
  %1396 = vmatpush1.msra.mxu0 0.0
  %1397 = vmatprep.subr.mxu0 0.0
  %1398 = vmatpush1.msra.mxu0 0.0
  %1399 = vmatprep.subr.mxu0 0.0
  %1400 = vmatpush1.msra.mxu0 0.0
  %1401 = vmatprep.subr.mxu0 0.0
  %1402 = vmatpush1.msra.mxu0 0.0
  %1403 = vmatprep.subr.mxu0 0.0
  %1404 = vmatpush1.msra.mxu0 0.0
  %1405 = vmatprep.subr.mxu0 0.0
  %1406 = vmatpush1.msra.mxu0 0.0
  %1407 = vmatprep.subr.mxu0 0.0
  %1408 = vmatpush1.msra.mxu0 0.0
  %1409 = vmatprep.subr.mxu0 0.0
  %1410 = vmatpush1.msra.mxu0 0.0
  %1411 = vmatprep.subr.mxu0 0.0
  %1412 = vmatpush1.msra.mxu0 0.0
  %1413 = vmatprep.subr.mxu0 0.0
  %1414 = vmatpush1.msra.mxu0 0.0
  %1415 = vmatprep.subr.mxu0 0.0
  %1416 = vmatpush1.msra.mxu0 0.0
  %1417 = vmatprep.subr.mxu0 0.0
  %1418 = vmatpush1.msra.mxu0 0.0
  %1419 = vmatprep.subr.mxu0 0.0
  %1420 = vmatpush1.msra.mxu0 0.0
  %1421 = vmatprep.subr.mxu0 0.0
  %1422 = vmatpush1.msra.mxu0 0.0
  %1423 = vmatprep.subr.mxu0 0.0
  %1424 = vmatpush1.msra.mxu0 0.0
  %1425 = vmatprep.subr.mxu0 0.0
  %1426 = vmatpush1.msra.mxu0 0.0
  %1427 = vmatprep.subr.mxu0 0.0
  %1428 = vmatpush1.msra.mxu0 0.0
  %1429 = vmatprep.subr.mxu0 0.0
  %1430 = vmatpush1.msra.mxu0 0.0
  %1431 = vmatprep.subr.mxu0 0.0
  %1432 = vmatpush1.msra.mxu0 0.0
  %1433 = vmatprep.subr.mxu0 0.0
  %1434 = vmatpush1.msra.mxu0 0.0
  %1435 = vmatprep.subr.mxu0 0.0
  %1436 = vmatpush1.msra.mxu0 0.0
  %1437 = vmatprep.subr.mxu0 0.0
  %1438 = vmatpush1.msra.mxu0 0.0
  %1439 = vmatprep.subr.mxu0 0.0
  %1440 = vmatpush1.msra.mxu0 0.0
  %1441 = vmatprep.subr.mxu0 0.0
  %1442 = vmatpush1.msra.mxu0 0.0
  %1443 = vmatprep.mubr.f32.mxu0 0.0
  %v1444 = vand.u32 %v1132, 4294901760
  %v1445 = vsub.f32 %v1132, %v1444
  %v1446 = vand.u32 %v1445, 4294901760
  %1447 = vmatmul.mubr.f32.gmra.mrb[0].mxu0 %v1446
  %v1448 = vpop.f32.mrb[0].mxu0
  %v1449 = vadd.f32 %v1373, %v1448
  %v1450 = vpop.f32.mrb[0].mxu0
  %1451 = vdwg.mxu0
  %1452 = vmatprep.subr.mxu0 0.0
  %v1453 = vand.u32 %v1123, 4294901760
  %v1454 = vsub.f32 %v1123, %v1453
  %v1455 = vand.u32 %v1454, 4294901760
  %1456 = vmatpush1.msra.mxu0 %v1455
  %1457 = vmatprep.subr.mxu0 0.0
  %v1458 = vand.u32 %v1124, 4294901760
  %v1459 = vsub.f32 %v1124, %v1458
  %v1460 = vand.u32 %v1459, 4294901760
  %1461 = vmatpush1.msra.mxu0 %v1460
  %1462 = vmatprep.subr.mxu0 0.0
  %v1463 = vand.u32 %v1125, 4294901760
  %v1464 = vsub.f32 %v1125, %v1463
  %v1465 = vand.u32 %v1464, 4294901760
  %1466 = vmatpush1.msra.mxu0 %v1465
  %1467 = vmatprep.subr.mxu0 0.0
  %1468 = vmatpush1.msra.mxu0 0.0
  %1469 = vmatprep.subr.mxu0 0.0
  %1470 = vmatpush1.msra.mxu0 0.0
  %1471 = vmatprep.subr.mxu0 0.0
  %1472 = vmatpush1.msra.mxu0 0.0
  %1473 = vmatprep.subr.mxu0 0.0
  %1474 = vmatpush1.msra.mxu0 0.0
  %1475 = vmatprep.subr.mxu0 0.0
  %1476 = vmatpush1.msra.mxu0 0.0
  %1477 = vmatprep.subr.mxu0 0.0
  %1478 = vmatpush1.msra.mxu0 0.0
  %1479 = vmatprep.subr.mxu0 0.0
  %1480 = vmatpush1.msra.mxu0 0.0
  %1481 = vmatprep.subr.mxu0 0.0
  %1482 = vmatpush1.msra.mxu0 0.0
  %1483 = vmatprep.subr.mxu0 0.0
  %1484 = vmatpush1.msra.mxu0 0.0
  %1485 = vmatprep.subr.mxu0 0.0
  %1486 = vmatpush1.msra.mxu0 0.0
  %1487 = vmatprep.subr.mxu0 0.0
  %1488 = vmatpush1.msra.mxu0 0.0
  %1489 = vmatprep.subr.mxu0 0.0
  %1490 = vmatpush1.msra.mxu0 0.0
  %1491 = vmatprep.subr.mxu0 0.0
  %1492 = vmatpush1.msra.mxu0 0.0
  %1493 = vmatprep.subr.mxu0 0.0
  %1494 = vmatpush1.msra.mxu0 0.0
  %1495 = vmatprep.subr.mxu0 0.0
  %1496 = vmatpush1.msra.mxu0 0.0
  %1497 = vmatprep.subr.mxu0 0.0
  %1498 = vmatpush1.msra.mxu0 0.0
  %1499 = vmatprep.subr.mxu0 0.0
  %1500 = vmatpush1.msra.mxu0 0.0
  %1501 = vmatprep.subr.mxu0 0.0
  %1502 = vmatpush1.msra.mxu0 0.0
  %1503 = vmatprep.subr.mxu0 0.0
  %1504 = vmatpush1.msra.mxu0 0.0
  %1505 = vmatprep.subr.mxu0 0.0
  %1506 = vmatpush1.msra.mxu0 0.0
  %1507 = vmatprep.subr.mxu0 0.0
  %1508 = vmatpush1.msra.mxu0 0.0
  %1509 = vmatprep.subr.mxu0 0.0
  %1510 = vmatpush1.msra.mxu0 0.0
  %1511 = vmatprep.subr.mxu0 0.0
  %1512 = vmatpush1.msra.mxu0 0.0
  %1513 = vmatprep.subr.mxu0 0.0
  %1514 = vmatpush1.msra.mxu0 0.0
  %1515 = vmatprep.subr.mxu0 0.0
  %1516 = vmatpush1.msra.mxu0 0.0
  %1517 = vmatprep.subr.mxu0 0.0
  %1518 = vmatpush1.msra.mxu0 0.0
  %1519 = vmatprep.subr.mxu0 0.0
  %1520 = vmatpush1.msra.mxu0 0.0
  %1521 = vmatprep.subr.mxu0 0.0
  %1522 = vmatpush1.msra.mxu0 0.0
  %1523 = vmatprep.subr.mxu0 0.0
  %1524 = vmatpush1.msra.mxu0 0.0
  %1525 = vmatprep.mubr.f32.mxu0 0.0
  %v1526 = vand.u32 %v1132, 4294901760
  %1527 = vmatmul.mubr.f32.gmra.mrb[0].mxu0 %v1526
  %v1528 = vpop.f32.mrb[0].mxu0
  %v1529 = vadd.f32 %v1449, %v1528
  %v1530 = vpop.f32.mrb[0].mxu0
  %1531 = vdwg.mxu0
  %1532 = vmatprep.subr.mxu0 0.0
  %v1533 = vand.u32 %v1123, 4294901760
  %1534 = vmatpush1.msra.mxu0 %v1533
  %1535 = vmatprep.subr.mxu0 0.0
  %v1536 = vand.u32 %v1124, 4294901760
  %1537 = vmatpush1.msra.mxu0 %v1536
  %1538 = vmatprep.subr.mxu0 0.0
  %v1539 = vand.u32 %v1125, 4294901760
  %1540 = vmatpush1.msra.mxu0 %v1539
  %1541 = vmatprep.subr.mxu0 0.0
  %1542 = vmatpush1.msra.mxu0 0.0
  %1543 = vmatprep.subr.mxu0 0.0
  %1544 = vmatpush1.msra.mxu0 0.0
  %1545 = vmatprep.subr.mxu0 0.0
  %1546 = vmatpush1.msra.mxu0 0.0
  %1547 = vmatprep.subr.mxu0 0.0
  %1548 = vmatpush1.msra.mxu0 0.0
  %1549 = vmatprep.subr.mxu0 0.0
  %1550 = vmatpush1.msra.mxu0 0.0
  %1551 = vmatprep.subr.mxu0 0.0
  %1552 = vmatpush1.msra.mxu0 0.0
  %1553 = vmatprep.subr.mxu0 0.0
  %1554 = vmatpush1.msra.mxu0 0.0
  %1555 = vmatprep.subr.mxu0 0.0
  %1556 = vmatpush1.msra.mxu0 0.0
  %1557 = vmatprep.subr.mxu0 0.0
  %1558 = vmatpush1.msra.mxu0 0.0
  %1559 = vmatprep.subr.mxu0 0.0
  %1560 = vmatpush1.msra.mxu0 0.0
  %1561 = vmatprep.subr.mxu0 0.0
  %1562 = vmatpush1.msra.mxu0 0.0
  %1563 = vmatprep.subr.mxu0 0.0
  %1564 = vmatpush1.msra.mxu0 0.0
  %1565 = vmatprep.subr.mxu0 0.0
  %1566 = vmatpush1.msra.mxu0 0.0
  %1567 = vmatprep.subr.mxu0 0.0
  %1568 = vmatpush1.msra.mxu0 0.0
  %1569 = vmatprep.subr.mxu0 0.0
  %1570 = vmatpush1.msra.mxu0 0.0
  %1571 = vmatprep.subr.mxu0 0.0
  %1572 = vmatpush1.msra.mxu0 0.0
  %1573 = vmatprep.subr.mxu0 0.0
  %1574 = vmatpush1.msra.mxu0 0.0
  %1575 = vmatprep.subr.mxu0 0.0
  %1576 = vmatpush1.msra.mxu0 0.0
  %1577 = vmatprep.subr.mxu0 0.0
  %1578 = vmatpush1.msra.mxu0 0.0
  %1579 = vmatprep.subr.mxu0 0.0
  %1580 = vmatpush1.msra.mxu0 0.0
  %1581 = vmatprep.subr.mxu0 0.0
  %1582 = vmatpush1.msra.mxu0 0.0
  %1583 = vmatprep.subr.mxu0 0.0
  %1584 = vmatpush1.msra.mxu0 0.0
  %1585 = vmatprep.subr.mxu0 0.0
  %1586 = vmatpush1.msra.mxu0 0.0
  %1587 = vmatprep.subr.mxu0 0.0
  %1588 = vmatpush1.msra.mxu0 0.0
  %1589 = vmatprep.subr.mxu0 0.0
  %1590 = vmatpush1.msra.mxu0 0.0
  %1591 = vmatprep.subr.mxu0 0.0
  %1592 = vmatpush1.msra.mxu0 0.0
  %1593 = vmatprep.subr.mxu0 0.0
  %1594 = vmatpush1.msra.mxu0 0.0
  %1595 = vmatprep.subr.mxu0 0.0
  %1596 = vmatpush1.msra.mxu0 0.0
  %1597 = vmatprep.subr.mxu0 0.0
  %1598 = vmatpush1.msra.mxu0 0.0
  %1599 = vmatprep.mubr.f32.mxu0 0.0
  %v1600 = vand.u32 %v1132, 4294901760
  %1601 = vmatmul.mubr.f32.gmra.mrb[0].mxu0 %v1600
  %v1602 = vpop.f32.mrb[0].mxu0
  %v1603 = vadd.f32 %v1529, %v1602
  %v1604 = vpop.f32.mrb[0].mxu0
  %1605 = vdwg.mxu0
  %v1606 = vld [vmem:[%s13] sm:$0xff]
  %v1607 = vld [vmem:[%s13 + $0x8] sm:$0xff]
  %v1608 = vld [vmem:[%s13 + $0x10] sm:$0xff]
  %v1609 = vld [vmem:[%s13 + $0x18] sm:$0xff]
  %v1610 = vld [vmem:[%s13 + $0x20] sm:$0xff]
  %v1611 = vld [vmem:[%s13 + $0x28] sm:$0xff]
  %v1612 = vld [vmem:[%s13 + $0x30] sm:$0xff]
  %v1613 = vld [vmem:[%s13 + $0x38] sm:$0xff]
  %v1614 = vld [vmem:[%s13 + $0x40] sm:$0xff]
  %v1615 = vld [vmem:[%s13 + $0x48] sm:$0xff]
  %v1616 = vld [vmem:[%s13 + $0x50] sm:$0xff]
  %v1617 = vld [vmem:[%s13 + $0x58] sm:$0xff]
  %v1618 = vld [vmem:[%s13 + $0x60] sm:$0xff]
  %v1619 = vld [vmem:[%s13 + $0x68] sm:$0xff]
  %v1620 = vld [vmem:[%s13 + $0x70] sm:$0xff]
  %v1621 = vld [vmem:[%s13 + $0x78] sm:$0xff]
  %1622 = vmatprep.subr.mxu0 0.0
  %v1623 = vand.u32 %v1606, 4294901760
  %1624 = vmatpush1.msra.mxu0 %v1623
  %1625 = vmatprep.subr.mxu0 0.0
  %v1626 = vand.u32 %v1607, 4294901760
  %1627 = vmatpush1.msra.mxu0 %v1626
  %1628 = vmatprep.subr.mxu0 0.0
  %v1629 = vand.u32 %v1608, 4294901760
  %1630 = vmatpush1.msra.mxu0 %v1629
  %1631 = vmatprep.subr.mxu0 0.0
  %v1632 = vand.u32 %v1609, 4294901760
  %1633 = vmatpush1.msra.mxu0 %v1632
  %1634 = vmatprep.subr.mxu0 0.0
  %v1635 = vand.u32 %v1610, 4294901760
  %1636 = vmatpush1.msra.mxu0 %v1635
  %1637 = vmatprep.subr.mxu0 0.0
  %v1638 = vand.u32 %v1611, 4294901760
  %1639 = vmatpush1.msra.mxu0 %v1638
  %1640 = vmatprep.subr.mxu0 0.0
  %v1641 = vand.u32 %v1612, 4294901760
  %1642 = vmatpush1.msra.mxu0 %v1641
  %1643 = vmatprep.subr.mxu0 0.0
  %v1644 = vand.u32 %v1613, 4294901760
  %1645 = vmatpush1.msra.mxu0 %v1644
  %1646 = vmatprep.subr.mxu0 0.0
  %v1647 = vand.u32 %v1614, 4294901760
  %1648 = vmatpush1.msra.mxu0 %v1647
  %1649 = vmatprep.subr.mxu0 0.0
  %v1650 = vand.u32 %v1615, 4294901760
  %1651 = vmatpush1.msra.mxu0 %v1650
  %1652 = vmatprep.subr.mxu0 0.0
  %v1653 = vand.u32 %v1616, 4294901760
  %1654 = vmatpush1.msra.mxu0 %v1653
  %1655 = vmatprep.subr.mxu0 0.0
  %v1656 = vand.u32 %v1617, 4294901760
  %1657 = vmatpush1.msra.mxu0 %v1656
  %1658 = vmatprep.subr.mxu0 0.0
  %v1659 = vand.u32 %v1618, 4294901760
  %1660 = vmatpush1.msra.mxu0 %v1659
  %1661 = vmatprep.subr.mxu0 0.0
  %v1662 = vand.u32 %v1619, 4294901760
  %1663 = vmatpush1.msra.mxu0 %v1662
  %1664 = vmatprep.subr.mxu0 0.0
  %v1665 = vand.u32 %v1620, 4294901760
  %1666 = vmatpush1.msra.mxu0 %v1665
  %1667 = vmatprep.subr.mxu0 0.0
  %v1668 = vand.u32 %v1621, 4294901760
  %1669 = vmatpush1.msra.mxu0 %v1668
  %1670 = vmatprep.subr.mxu0 0.0
  %1671 = vmatpush1.msra.mxu0 0.0
  %1672 = vmatprep.subr.mxu0 0.0
  %1673 = vmatpush1.msra.mxu0 0.0
  %1674 = vmatprep.subr.mxu0 0.0
  %1675 = vmatpush1.msra.mxu0 0.0
  %1676 = vmatprep.subr.mxu0 0.0
  %1677 = vmatpush1.msra.mxu0 0.0
  %1678 = vmatprep.subr.mxu0 0.0
  %1679 = vmatpush1.msra.mxu0 0.0
  %1680 = vmatprep.subr.mxu0 0.0
  %1681 = vmatpush1.msra.mxu0 0.0
  %1682 = vmatprep.subr.mxu0 0.0
  %1683 = vmatpush1.msra.mxu0 0.0
  %1684 = vmatprep.subr.mxu0 0.0
  %1685 = vmatpush1.msra.mxu0 0.0
  %1686 = vmatprep.subr.mxu0 0.0
  %1687 = vmatpush1.msra.mxu0 0.0
  %1688 = vmatprep.subr.mxu0 0.0
  %1689 = vmatpush1.msra.mxu0 0.0
  %1690 = vmatprep.subr.mxu0 0.0
  %1691 = vmatpush1.msra.mxu0 0.0
  %1692 = vmatprep.subr.mxu0 0.0
  %1693 = vmatpush1.msra.mxu0 0.0
  %1694 = vmatprep.subr.mxu0 0.0
  %1695 = vmatpush1.msra.mxu0 0.0
  %1696 = vmatprep.subr.mxu0 0.0
  %1697 = vmatpush1.msra.mxu0 0.0
  %1698 = vmatprep.subr.mxu0 0.0
  %1699 = vmatpush1.msra.mxu0 0.0
  %1700 = vmatprep.subr.mxu0 0.0
  %1701 = vmatpush1.msra.mxu0 0.0
  %1702 = vmatprep.mubr.f32.mxu0 0.0
  %v1703 = vand.u32 %v1603, 4294901760
  %v1704 = vsub.f32 %v1603, %v1703
  %v1705 = vand.u32 %v1704, 4294901760
  %v1706 = vsub.f32 %v1704, %v1705
  %v1707 = vand.u32 %v1706, 4294901760
  %1708 = vmatmul.mubr.f32.gmra.mrb[0].mxu0 %v1707
  %v1709 = vpop.f32.mrb[0].mxu0
  %v1710 = vadd.f32 0.0, %v1709
  %v1711 = vpop.f32.mrb[0].mxu0
  %1712 = vdwg.mxu0
  %1713 = vmatprep.subr.mxu0 0.0
  %v1714 = vand.u32 %v1606, 4294901760
  %v1715 = vsub.f32 %v1606, %v1714
  %v1716 = vand.u32 %v1715, 4294901760
  %v1717 = vsub.f32 %v1715, %v1716
  %v1718 = vand.u32 %v1717, 4294901760
  %1719 = vmatpush1.msra.mxu0 %v1718
  %1720 = vmatprep.subr.mxu0 0.0
  %v1721 = vand.u32 %v1607, 4294901760
  %v1722 = vsub.f32 %v1607, %v1721
  %v1723 = vand.u32 %v1722, 4294901760
  %v1724 = vsub.f32 %v1722, %v1723
  %v1725 = vand.u32 %v1724, 4294901760
  %1726 = vmatpush1.msra.mxu0 %v1725
  %1727 = vmatprep.subr.mxu0 0.0
  %v1728 = vand.u32 %v1608, 4294901760
  %v1729 = vsub.f32 %v1608, %v1728
  %v1730 = vand.u32 %v1729, 4294901760
  %v1731 = vsub.f32 %v1729, %v1730
  %v1732 = vand.u32 %v1731, 4294901760
  %1733 = vmatpush1.msra.mxu0 %v1732
  %1734 = vmatprep.subr.mxu0 0.0
  %v1735 = vand.u32 %v1609, 4294901760
  %v1736 = vsub.f32 %v1609, %v1735
  %v1737 = vand.u32 %v1736, 4294901760
  %v1738 = vsub.f32 %v1736, %v1737
  %v1739 = vand.u32 %v1738, 4294901760
  %1740 = vmatpush1.msra.mxu0 %v1739
  %1741 = vmatprep.subr.mxu0 0.0
  %v1742 = vand.u32 %v1610, 4294901760
  %v1743 = vsub.f32 %v1610, %v1742
  %v1744 = vand.u32 %v1743, 4294901760
  %v1745 = vsub.f32 %v1743, %v1744
  %v1746 = vand.u32 %v1745, 4294901760
  %1747 = vmatpush1.msra.mxu0 %v1746
  %1748 = vmatprep.subr.mxu0 0.0
  %v1749 = vand.u32 %v1611, 4294901760
  %v1750 = vsub.f32 %v1611, %v1749
  %v1751 = vand.u32 %v1750, 4294901760
  %v1752 = vsub.f32 %v1750, %v1751
  %v1753 = vand.u32 %v1752, 4294901760
  %1754 = vmatpush1.msra.mxu0 %v1753
  %1755 = vmatprep.subr.mxu0 0.0
  %v1756 = vand.u32 %v1612, 4294901760
  %v1757 = vsub.f32 %v1612, %v1756
  %v1758 = vand.u32 %v1757, 4294901760
  %v1759 = vsub.f32 %v1757, %v1758
  %v1760 = vand.u32 %v1759, 4294901760
  %1761 = vmatpush1.msra.mxu0 %v1760
  %1762 = vmatprep.subr.mxu0 0.0
  %v1763 = vand.u32 %v1613, 4294901760
  %v1764 = vsub.f32 %v1613, %v1763
  %v1765 = vand.u32 %v1764, 4294901760
  %v1766 = vsub.f32 %v1764, %v1765
  %v1767 = vand.u32 %v1766, 4294901760
  %1768 = vmatpush1.msra.mxu0 %v1767
  %1769 = vmatprep.subr.mxu0 0.0
  %v1770 = vand.u32 %v1614, 4294901760
  %v1771 = vsub.f32 %v1614, %v1770
  %v1772 = vand.u32 %v1771, 4294901760
  %v1773 = vsub.f32 %v1771, %v1772
  %v1774 = vand.u32 %v1773, 4294901760
  %1775 = vmatpush1.msra.mxu0 %v1774
  %1776 = vmatprep.subr.mxu0 0.0
  %v1777 = vand.u32 %v1615, 4294901760
  %v1778 = vsub.f32 %v1615, %v1777
  %v1779 = vand.u32 %v1778, 4294901760
  %v1780 = vsub.f32 %v1778, %v1779
  %v1781 = vand.u32 %v1780, 4294901760
  %1782 = vmatpush1.msra.mxu0 %v1781
  %1783 = vmatprep.subr.mxu0 0.0
  %v1784 = vand.u32 %v1616, 4294901760
  %v1785 = vsub.f32 %v1616, %v1784
  %v1786 = vand.u32 %v1785, 4294901760
  %v1787 = vsub.f32 %v1785, %v1786
  %v1788 = vand.u32 %v1787, 4294901760
  %1789 = vmatpush1.msra.mxu0 %v1788
  %1790 = vmatprep.subr.mxu0 0.0
  %v1791 = vand.u32 %v1617, 4294901760
  %v1792 = vsub.f32 %v1617, %v1791
  %v1793 = vand.u32 %v1792, 4294901760
  %v1794 = vsub.f32 %v1792, %v1793
  %v1795 = vand.u32 %v1794, 4294901760
  %1796 = vmatpush1.msra.mxu0 %v1795
  %1797 = vmatprep.subr.mxu0 0.0
  %v1798 = vand.u32 %v1618, 4294901760
  %v1799 = vsub.f32 %v1618, %v1798
  %v1800 = vand.u32 %v1799, 4294901760
  %v1801 = vsub.f32 %v1799, %v1800
  %v1802 = vand.u32 %v1801, 4294901760
  %1803 = vmatpush1.msra.mxu0 %v1802
  %1804 = vmatprep.subr.mxu0 0.0
  %v1805 = vand.u32 %v1619, 4294901760
  %v1806 = vsub.f32 %v1619, %v1805
  %v1807 = vand.u32 %v1806, 4294901760
  %v1808 = vsub.f32 %v1806, %v1807
  %v1809 = vand.u32 %v1808, 4294901760
  %1810 = vmatpush1.msra.mxu0 %v1809
  %1811 = vmatprep.subr.mxu0 0.0
  %v1812 = vand.u32 %v1620, 4294901760
  %v1813 = vsub.f32 %v1620, %v1812
  %v1814 = vand.u32 %v1813, 4294901760
  %v1815 = vsub.f32 %v1813, %v1814
  %v1816 = vand.u32 %v1815, 4294901760
  %1817 = vmatpush1.msra.mxu0 %v1816
  %1818 = vmatprep.subr.mxu0 0.0
  %v1819 = vand.u32 %v1621, 4294901760
  %v1820 = vsub.f32 %v1621, %v1819
  %v1821 = vand.u32 %v1820, 4294901760
  %v1822 = vsub.f32 %v1820, %v1821
  %v1823 = vand.u32 %v1822, 4294901760
  %1824 = vmatpush1.msra.mxu0 %v1823
  %1825 = vmatprep.subr.mxu0 0.0
  %1826 = vmatpush1.msra.mxu0 0.0
  %1827 = vmatprep.subr.mxu0 0.0
  %1828 = vmatpush1.msra.mxu0 0.0
  %1829 = vmatprep.subr.mxu0 0.0
  %1830 = vmatpush1.msra.mxu0 0.0
  %1831 = vmatprep.subr.mxu0 0.0
  %1832 = vmatpush1.msra.mxu0 0.0
  %1833 = vmatprep.subr.mxu0 0.0
  %1834 = vmatpush1.msra.mxu0 0.0
  %1835 = vmatprep.subr.mxu0 0.0
  %1836 = vmatpush1.msra.mxu0 0.0
  %1837 = vmatprep.subr.mxu0 0.0
  %1838 = vmatpush1.msra.mxu0 0.0
  %1839 = vmatprep.subr.mxu0 0.0
  %1840 = vmatpush1.msra.mxu0 0.0
  %1841 = vmatprep.subr.mxu0 0.0
  %1842 = vmatpush1.msra.mxu0 0.0
  %1843 = vmatprep.subr.mxu0 0.0
  %1844 = vmatpush1.msra.mxu0 0.0
  %1845 = vmatprep.subr.mxu0 0.0
  %1846 = vmatpush1.msra.mxu0 0.0
  %1847 = vmatprep.subr.mxu0 0.0
  %1848 = vmatpush1.msra.mxu0 0.0
  %1849 = vmatprep.subr.mxu0 0.0
  %1850 = vmatpush1.msra.mxu0 0.0
  %1851 = vmatprep.subr.mxu0 0.0
  %1852 = vmatpush1.msra.mxu0 0.0
  %1853 = vmatprep.subr.mxu0 0.0
  %1854 = vmatpush1.msra.mxu0 0.0
  %1855 = vmatprep.subr.mxu0 0.0
  %1856 = vmatpush1.msra.mxu0 0.0
  %1857 = vmatprep.mubr.f32.mxu0 0.0
  %v1858 = vand.u32 %v1603, 4294901760
  %1859 = vmatmul.mubr.f32.gmra.mrb[0].mxu0 %v1858
  %v1860 = vpop.f32.mrb[0].mxu0
  %v1861 = vadd.f32 %v1710, %v1860
  %v1862 = vpop.f32.mrb[0].mxu0
  %1863 = vdwg.mxu0
  %1864 = vmatprep.subr.mxu0 0.0
  %v1865 = vand.u32 %v1606, 4294901760
  %v1866 = vsub.f32 %v1606, %v1865
  %1867 = vmatpush1.msra.mxu0 %v1866
  %1868 = vmatprep.subr.mxu0 0.0
  %v1869 = vand.u32 %v1607, 4294901760
  %v1870 = vsub.f32 %v1607, %v1869
  %1871 = vmatpush1.msra.mxu0 %v1870
  %1872 = vmatprep.subr.mxu0 0.0
  %v1873 = vand.u32 %v1608, 4294901760
  %v1874 = vsub.f32 %v1608, %v1873
  %1875 = vmatpush1.msra.mxu0 %v1874
  %1876 = vmatprep.subr.mxu0 0.0
  %v1877 = vand.u32 %v1609, 4294901760
  %v1878 = vsub.f32 %v1609, %v1877
  %1879 = vmatpush1.msra.mxu0 %v1878
  %1880 = vmatprep.subr.mxu0 0.0
  %v1881 = vand.u32 %v1610, 4294901760
  %v1882 = vsub.f32 %v1610, %v1881
  %1883 = vmatpush1.msra.mxu0 %v1882
  %1884 = vmatprep.subr.mxu0 0.0
  %v1885 = vand.u32 %v1611, 4294901760
  %v1886 = vsub.f32 %v1611, %v1885
  %1887 = vmatpush1.msra.mxu0 %v1886
  %1888 = vmatprep.subr.mxu0 0.0
  %v1889 = vand.u32 %v1612, 4294901760
  %v1890 = vsub.f32 %v1612, %v1889
  %1891 = vmatpush1.msra.mxu0 %v1890
  %1892 = vmatprep.subr.mxu0 0.0
  %v1893 = vand.u32 %v1613, 4294901760
  %v1894 = vsub.f32 %v1613, %v1893
  %1895 = vmatpush1.msra.mxu0 %v1894
  %1896 = vmatprep.subr.mxu0 0.0
  %v1897 = vand.u32 %v1614, 4294901760
  %v1898 = vsub.f32 %v1614, %v1897
  %1899 = vmatpush1.msra.mxu0 %v1898
  %1900 = vmatprep.subr.mxu0 0.0
  %v1901 = vand.u32 %v1615, 4294901760
  %v1902 = vsub.f32 %v1615, %v1901
  %1903 = vmatpush1.msra.mxu0 %v1902
  %1904 = vmatprep.subr.mxu0 0.0
  %v1905 = vand.u32 %v1616, 4294901760
  %v1906 = vsub.f32 %v1616, %v1905
  %1907 = vmatpush1.msra.mxu0 %v1906
  %1908 = vmatprep.subr.mxu0 0.0
  %v1909 = vand.u32 %v1617, 4294901760
  %v1910 = vsub.f32 %v1617, %v1909
  %1911 = vmatpush1.msra.mxu0 %v1910
  %1912 = vmatprep.subr.mxu0 0.0
  %v1913 = vand.u32 %v1618, 4294901760
  %v1914 = vsub.f32 %v1618, %v1913
  %1915 = vmatpush1.msra.mxu0 %v1914
  %1916 = vmatprep.subr.mxu0 0.0
  %v1917 = vand.u32 %v1619, 4294901760
  %v1918 = vsub.f32 %v1619, %v1917
  %1919 = vmatpush1.msra.mxu0 %v1918
  %1920 = vmatprep.subr.mxu0 0.0
  %v1921 = vand.u32 %v1620, 4294901760
  %v1922 = vsub.f32 %v1620, %v1921
  %1923 = vmatpush1.msra.mxu0 %v1922
  %1924 = vmatprep.subr.mxu0 0.0
  %v1925 = vand.u32 %v1621, 4294901760
  %v1926 = vsub.f32 %v1621, %v1925
  %1927 = vmatpush1.msra.mxu0 %v1926
  %1928 = vmatprep.subr.mxu0 0.0
  %1929 = vmatpush1.msra.mxu0 0.0
  %1930 = vmatprep.subr.mxu0 0.0
  %1931 = vmatpush1.msra.mxu0 0.0
  %1932 = vmatprep.subr.mxu0 0.0
  %1933 = vmatpush1.msra.mxu0 0.0
  %1934 = vmatprep.subr.mxu0 0.0
  %1935 = vmatpush1.msra.mxu0 0.0
  %1936 = vmatprep.subr.mxu0 0.0
  %1937 = vmatpush1.msra.mxu0 0.0
  %1938 = vmatprep.subr.mxu0 0.0
  %1939 = vmatpush1.msra.mxu0 0.0
  %1940 = vmatprep.subr.mxu0 0.0
  %1941 = vmatpush1.msra.mxu0 0.0
  %1942 = vmatprep.subr.mxu0 0.0
  %1943 = vmatpush1.msra.mxu0 0.0
  %1944 = vmatprep.subr.mxu0 0.0
  %1945 = vmatpush1.msra.mxu0 0.0
  %1946 = vmatprep.subr.mxu0 0.0
  %1947 = vmatpush1.msra.mxu0 0.0
  %1948 = vmatprep.subr.mxu0 0.0
  %1949 = vmatpush1.msra.mxu0 0.0
  %1950 = vmatprep.subr.mxu0 0.0
  %1951 = vmatpush1.msra.mxu0 0.0
  %1952 = vmatprep.subr.mxu0 0.0
  %1953 = vmatpush1.msra.mxu0 0.0
  %1954 = vmatprep.subr.mxu0 0.0
  %1955 = vmatpush1.msra.mxu0 0.0
  %1956 = vmatprep.subr.mxu0 0.0
  %1957 = vmatpush1.msra.mxu0 0.0
  %1958 = vmatprep.subr.mxu0 0.0
  %1959 = vmatpush1.msra.mxu0 0.0
  %1960 = vmatprep.mubr.f32.mxu0 0.0
  %v1961 = vand.u32 %v1603, 4294901760
  %v1962 = vsub.f32 %v1603, %v1961
  %1963 = vmatmul.mubr.f32.gmra.mrb[0].mxu0 %v1962
  %v1964 = vpop.f32.mrb[0].mxu0
  %v1965 = vadd.f32 %v1861, %v1964
  %v1966 = vpop.f32.mrb[0].mxu0
  %1967 = vdwg.mxu0
  %1968 = vmatprep.subr.mxu0 0.0
  %v1969 = vand.u32 %v1606, 4294901760
  %1970 = vmatpush1.msra.mxu0 %v1969
  %1971 = vmatprep.subr.mxu0 0.0
  %v1972 = vand.u32 %v1607, 4294901760
  %1973 = vmatpush1.msra.mxu0 %v1972
  %1974 = vmatprep.subr.mxu0 0.0
  %v1975 = vand.u32 %v1608, 4294901760
  %1976 = vmatpush1.msra.mxu0 %v1975
  %1977 = vmatprep.subr.mxu0 0.0
  %v1978 = vand.u32 %v1609, 4294901760
  %1979 = vmatpush1.msra.mxu0 %v1978
  %1980 = vmatprep.subr.mxu0 0.0
  %v1981 = vand.u32 %v1610, 4294901760
  %1982 = vmatpush1.msra.mxu0 %v1981
  %1983 = vmatprep.subr.mxu0 0.0
  %v1984 = vand.u32 %v1611, 4294901760
  %1985 = vmatpush1.msra.mxu0 %v1984
  %1986 = vmatprep.subr.mxu0 0.0
  %v1987 = vand.u32 %v1612, 4294901760
  %1988 = vmatpush1.msra.mxu0 %v1987
  %1989 = vmatprep.subr.mxu0 0.0
  %v1990 = vand.u32 %v1613, 4294901760
  %1991 = vmatpush1.msra.mxu0 %v1990
  %1992 = vmatprep.subr.mxu0 0.0
  %v1993 = vand.u32 %v1614, 4294901760
  %1994 = vmatpush1.msra.mxu0 %v1993
  %1995 = vmatprep.subr.mxu0 0.0
  %v1996 = vand.u32 %v1615, 4294901760
  %1997 = vmatpush1.msra.mxu0 %v1996
  %1998 = vmatprep.subr.mxu0 0.0
  %v1999 = vand.u32 %v1616, 4294901760
  %2000 = vmatpush1.msra.mxu0 %v1999
  %2001 = vmatprep.subr.mxu0 0.0
  %v2002 = vand.u32 %v1617, 4294901760
  %2003 = vmatpush1.msra.mxu0 %v2002
  %2004 = vmatprep.subr.mxu0 0.0
  %v2005 = vand.u32 %v1618, 4294901760
  %2006 = vmatpush1.msra.mxu0 %v2005
  %2007 = vmatprep.subr.mxu0 0.0
  %v2008 = vand.u32 %v1619, 4294901760
  %2009 = vmatpush1.msra.mxu0 %v2008
  %2010 = vmatprep.subr.mxu0 0.0
  %v2011 = vand.u32 %v1620, 4294901760
  %2012 = vmatpush1.msra.mxu0 %v2011
  %2013 = vmatprep.subr.mxu0 0.0
  %v2014 = vand.u32 %v1621, 4294901760
  %2015 = vmatpush1.msra.mxu0 %v2014
  %2016 = vmatprep.subr.mxu0 0.0
  %2017 = vmatpush1.msra.mxu0 0.0
  %2018 = vmatprep.subr.mxu0 0.0
  %2019 = vmatpush1.msra.mxu0 0.0
  %2020 = vmatprep.subr.mxu0 0.0
  %2021 = vmatpush1.msra.mxu0 0.0
  %2022 = vmatprep.subr.mxu0 0.0
  %2023 = vmatpush1.msra.mxu0 0.0
  %2024 = vmatprep.subr.mxu0 0.0
  %2025 = vmatpush1.msra.mxu0 0.0
  %2026 = vmatprep.subr.mxu0 0.0
  %2027 = vmatpush1.msra.mxu0 0.0
  %2028 = vmatprep.subr.mxu0 0.0
  %2029 = vmatpush1.msra.mxu0 0.0
  %2030 = vmatprep.subr.mxu0 0.0
  %2031 = vmatpush1.msra.mxu0 0.0
  %2032 = vmatprep.subr.mxu0 0.0
  %2033 = vmatpush1.msra.mxu0 0.0
  %2034 = vmatprep.subr.mxu0 0.0
  %2035 = vmatpush1.msra.mxu0 0.0
  %2036 = vmatprep.subr.mxu0 0.0
  %2037 = vmatpush1.msra.mxu0 0.0
  %2038 = vmatprep.subr.mxu0 0.0
  %2039 = vmatpush1.msra.mxu0 0.0
  %2040 = vmatprep.subr.mxu0 0.0
  %2041 = vmatpush1.msra.mxu0 0.0
  %2042 = vmatprep.subr.mxu0 0.0
  %2043 = vmatpush1.msra.mxu0 0.0
  %2044 = vmatprep.subr.mxu0 0.0
  %2045 = vmatpush1.msra.mxu0 0.0
  %2046 = vmatprep.subr.mxu0 0.0
  %2047 = vmatpush1.msra.mxu0 0.0
  %2048 = vmatprep.mubr.f32.mxu0 0.0
  %v2049 = vand.u32 %v1603, 4294901760
  %v2050 = vsub.f32 %v1603, %v2049
  %v2051 = vand.u32 %v2050, 4294901760
  %2052 = vmatmul.mubr.f32.gmra.mrb[0].mxu0 %v2051
  %v2053 = vpop.f32.mrb[0].mxu0
  %v2054 = vadd.f32 %v1965, %v2053
  %v2055 = vpop.f32.mrb[0].mxu0
  %2056 = vdwg.mxu0
  %2057 = vmatprep.subr.mxu0 0.0
  %v2058 = vand.u32 %v1606, 4294901760
  %v2059 = vsub.f32 %v1606, %v2058
  %v2060 = vand.u32 %v2059, 4294901760
  %2061 = vmatpush1.msra.mxu0 %v2060
  %2062 = vmatprep.subr.mxu0 0.0
  %v2063 = vand.u32 %v1607, 4294901760
  %v2064 = vsub.f32 %v1607, %v2063
  %v2065 = vand.u32 %v2064, 4294901760
  %2066 = vmatpush1.msra.mxu0 %v2065
  %2067 = vmatprep.subr.mxu0 0.0
  %v2068 = vand.u32 %v1608, 4294901760
  %v2069 = vsub.f32 %v1608, %v2068
  %v2070 = vand.u32 %v2069, 4294901760
  %2071 = vmatpush1.msra.mxu0 %v2070
  %2072 = vmatprep.subr.mxu0 0.0
  %v2073 = vand.u32 %v1609, 4294901760
  %v2074 = vsub.f32 %v1609, %v2073
  %v2075 = vand.u32 %v2074, 4294901760
  %2076 = vmatpush1.msra.mxu0 %v2075
  %2077 = vmatprep.subr.mxu0 0.0
  %v2078 = vand.u32 %v1610, 4294901760
  %v2079 = vsub.f32 %v1610, %v2078
  %v2080 = vand.u32 %v2079, 4294901760
  %2081 = vmatpush1.msra.mxu0 %v2080
  %2082 = vmatprep.subr.mxu0 0.0
  %v2083 = vand.u32 %v1611, 4294901760
  %v2084 = vsub.f32 %v1611, %v2083
  %v2085 = vand.u32 %v2084, 4294901760
  %2086 = vmatpush1.msra.mxu0 %v2085
  %2087 = vmatprep.subr.mxu0 0.0
  %v2088 = vand.u32 %v1612, 4294901760
  %v2089 = vsub.f32 %v1612, %v2088
  %v2090 = vand.u32 %v2089, 4294901760
  %2091 = vmatpush1.msra.mxu0 %v2090
  %2092 = vmatprep.subr.mxu0 0.0
  %v2093 = vand.u32 %v1613, 4294901760
  %v2094 = vsub.f32 %v1613, %v2093
  %v2095 = vand.u32 %v2094, 4294901760
  %2096 = vmatpush1.msra.mxu0 %v2095
  %2097 = vmatprep.subr.mxu0 0.0
  %v2098 = vand.u32 %v1614, 4294901760
  %v2099 = vsub.f32 %v1614, %v2098
  %v2100 = vand.u32 %v2099, 4294901760
  %2101 = vmatpush1.msra.mxu0 %v2100
  %2102 = vmatprep.subr.mxu0 0.0
  %v2103 = vand.u32 %v1615, 4294901760
  %v2104 = vsub.f32 %v1615, %v2103
  %v2105 = vand.u32 %v2104, 4294901760
  %2106 = vmatpush1.msra.mxu0 %v2105
  %2107 = vmatprep.subr.mxu0 0.0
  %v2108 = vand.u32 %v1616, 4294901760
  %v2109 = vsub.f32 %v1616, %v2108
  %v2110 = vand.u32 %v2109, 4294901760
  %2111 = vmatpush1.msra.mxu0 %v2110
  %2112 = vmatprep.subr.mxu0 0.0
  %v2113 = vand.u32 %v1617, 4294901760
  %v2114 = vsub.f32 %v1617, %v2113
  %v2115 = vand.u32 %v2114, 4294901760
  %2116 = vmatpush1.msra.mxu0 %v2115
  %2117 = vmatprep.subr.mxu0 0.0
  %v2118 = vand.u32 %v1618, 4294901760
  %v2119 = vsub.f32 %v1618, %v2118
  %v2120 = vand.u32 %v2119, 4294901760
  %2121 = vmatpush1.msra.mxu0 %v2120
  %2122 = vmatprep.subr.mxu0 0.0
  %v2123 = vand.u32 %v1619, 4294901760
  %v2124 = vsub.f32 %v1619, %v2123
  %v2125 = vand.u32 %v2124, 4294901760
  %2126 = vmatpush1.msra.mxu0 %v2125
  %2127 = vmatprep.subr.mxu0 0.0
  %v2128 = vand.u32 %v1620, 4294901760
  %v2129 = vsub.f32 %v1620, %v2128
  %v2130 = vand.u32 %v2129, 4294901760
  %2131 = vmatpush1.msra.mxu0 %v2130
  %2132 = vmatprep.subr.mxu0 0.0
  %v2133 = vand.u32 %v1621, 4294901760
  %v2134 = vsub.f32 %v1621, %v2133
  %v2135 = vand.u32 %v2134, 4294901760
  %2136 = vmatpush1.msra.mxu0 %v2135
  %2137 = vmatprep.subr.mxu0 0.0
  %2138 = vmatpush1.msra.mxu0 0.0
  %2139 = vmatprep.subr.mxu0 0.0
  %2140 = vmatpush1.msra.mxu0 0.0
  %2141 = vmatprep.subr.mxu0 0.0
  %2142 = vmatpush1.msra.mxu0 0.0
  %2143 = vmatprep.subr.mxu0 0.0
  %2144 = vmatpush1.msra.mxu0 0.0
  %2145 = vmatprep.subr.mxu0 0.0
  %2146 = vmatpush1.msra.mxu0 0.0
  %2147 = vmatprep.subr.mxu0 0.0
  %2148 = vmatpush1.msra.mxu0 0.0
  %2149 = vmatprep.subr.mxu0 0.0
  %2150 = vmatpush1.msra.mxu0 0.0
  %2151 = vmatprep.subr.mxu0 0.0
  %2152 = vmatpush1.msra.mxu0 0.0
  %2153 = vmatprep.subr.mxu0 0.0
  %2154 = vmatpush1.msra.mxu0 0.0
  %2155 = vmatprep.subr.mxu0 0.0
  %2156 = vmatpush1.msra.mxu0 0.0
  %2157 = vmatprep.subr.mxu0 0.0
  %2158 = vmatpush1.msra.mxu0 0.0
  %2159 = vmatprep.subr.mxu0 0.0
  %2160 = vmatpush1.msra.mxu0 0.0
  %2161 = vmatprep.subr.mxu0 0.0
  %2162 = vmatpush1.msra.mxu0 0.0
  %2163 = vmatprep.subr.mxu0 0.0
  %2164 = vmatpush1.msra.mxu0 0.0
  %2165 = vmatprep.subr.mxu0 0.0
  %2166 = vmatpush1.msra.mxu0 0.0
  %2167 = vmatprep.subr.mxu0 0.0
  %2168 = vmatpush1.msra.mxu0 0.0
  %2169 = vmatprep.mubr.f32.mxu0 0.0
  %v2170 = vand.u32 %v1603, 4294901760
  %2171 = vmatmul.mubr.f32.gmra.mrb[0].mxu0 %v2170
  %v2172 = vpop.f32.mrb[0].mxu0
  %v2173 = vadd.f32 %v2054, %v2172
  %v2174 = vpop.f32.mrb[0].mxu0
  %2175 = vdwg.mxu0
  %2176 = vmatprep.subr.mxu0 0.0
  %v2177 = vand.u32 %v1606, 4294901760
  %2178 = vmatpush1.msra.mxu0 %v2177
  %2179 = vmatprep.subr.mxu0 0.0
  %v2180 = vand.u32 %v1607, 4294901760
  %2181 = vmatpush1.msra.mxu0 %v2180
  %2182 = vmatprep.subr.mxu0 0.0
  %v2183 = vand.u32 %v1608, 4294901760
  %2184 = vmatpush1.msra.mxu0 %v2183
  %2185 = vmatprep.subr.mxu0 0.0
  %v2186 = vand.u32 %v1609, 4294901760
  %2187 = vmatpush1.msra.mxu0 %v2186
  %2188 = vmatprep.subr.mxu0 0.0
  %v2189 = vand.u32 %v1610, 4294901760
  %2190 = vmatpush1.msra.mxu0 %v2189
  %2191 = vmatprep.subr.mxu0 0.0
  %v2192 = vand.u32 %v1611, 4294901760
  %2193 = vmatpush1.msra.mxu0 %v2192
  %2194 = vmatprep.subr.mxu0 0.0
  %v2195 = vand.u32 %v1612, 4294901760
  %2196 = vmatpush1.msra.mxu0 %v2195
  %2197 = vmatprep.subr.mxu0 0.0
  %v2198 = vand.u32 %v1613, 4294901760
  %2199 = vmatpush1.msra.mxu0 %v2198
  %2200 = vmatprep.subr.mxu0 0.0
  %v2201 = vand.u32 %v1614, 4294901760
  %2202 = vmatpush1.msra.mxu0 %v2201
  %2203 = vmatprep.subr.mxu0 0.0
  %v2204 = vand.u32 %v1615, 4294901760
  %2205 = vmatpush1.msra.mxu0 %v2204
  %2206 = vmatprep.subr.mxu0 0.0
  %v2207 = vand.u32 %v1616, 4294901760
  %2208 = vmatpush1.msra.mxu0 %v2207
  %2209 = vmatprep.subr.mxu0 0.0
  %v2210 = vand.u32 %v1617, 4294901760
  %2211 = vmatpush1.msra.mxu0 %v2210
  %2212 = vmatprep.subr.mxu0 0.0
  %v2213 = vand.u32 %v1618, 4294901760
  %2214 = vmatpush1.msra.mxu0 %v2213
  %2215 = vmatprep.subr.mxu0 0.0
  %v2216 = vand.u32 %v1619, 4294901760
  %2217 = vmatpush1.msra.mxu0 %v2216
  %2218 = vmatprep.subr.mxu0 0.0
  %v2219 = vand.u32 %v1620, 4294901760
  %2220 = vmatpush1.msra.mxu0 %v2219
  %2221 = vmatprep.subr.mxu0 0.0
  %v2222 = vand.u32 %v1621, 4294901760
  %2223 = vmatpush1.msra.mxu0 %v2222
  %2224 = vmatprep.subr.mxu0 0.0
  %2225 = vmatpush1.msra.mxu0 0.0
  %2226 = vmatprep.subr.mxu0 0.0
  %2227 = vmatpush1.msra.mxu0 0.0
  %2228 = vmatprep.subr.mxu0 0.0
  %2229 = vmatpush1.msra.mxu0 0.0
  %2230 = vmatprep.subr.mxu0 0.0
  %2231 = vmatpush1.msra.mxu0 0.0
  %2232 = vmatprep.subr.mxu0 0.0
  %2233 = vmatpush1.msra.mxu0 0.0
  %2234 = vmatprep.subr.mxu0 0.0
  %2235 = vmatpush1.msra.mxu0 0.0
  %2236 = vmatprep.subr.mxu0 0.0
  %2237 = vmatpush1.msra.mxu0 0.0
  %2238 = vmatprep.subr.mxu0 0.0
  %2239 = vmatpush1.msra.mxu0 0.0
  %2240 = vmatprep.subr.mxu0 0.0
  %2241 = vmatpush1.msra.mxu0 0.0
  %2242 = vmatprep.subr.mxu0 0.0
  %2243 = vmatpush1.msra.mxu0 0.0
  %2244 = vmatprep.subr.mxu0 0.0
  %2245 = vmatpush1.msra.mxu0 0.0
  %2246 = vmatprep.subr.mxu0 0.0
  %2247 = vmatpush1.msra.mxu0 0.0
  %2248 = vmatprep.subr.mxu0 0.0
  %2249 = vmatpush1.msra.mxu0 0.0
  %2250 = vmatprep.subr.mxu0 0.0
  %2251 = vmatpush1.msra.mxu0 0.0
  %2252 = vmatprep.subr.mxu0 0.0
  %2253 = vmatpush1.msra.mxu0 0.0
  %2254 = vmatprep.subr.mxu0 0.0
  %2255 = vmatpush1.msra.mxu0 0.0
  %2256 = vmatprep.mubr.f32.mxu0 0.0
  %v2257 = vand.u32 %v1603, 4294901760
  %2258 = vmatmul.mubr.f32.gmra.mrb[0].mxu0 %v2257
  %v2259 = vpop.f32.mrb[0].mxu0
  %v2260 = vadd.f32 %v2173, %v2259
  %v2261 = vpop.f32.mrb[0].mxu0
  %2262 = vdwg.mxu0
  %vm2263 = vcmask 54272
  %2264 = vst.msk [vmem:[%s14] sm:$0x3f] %vm2263, %v2260
  %2266 = vrot.lane.b32.xlu0 %v2260, 121
  %v2267 = vpop.permute.xlu0 %2266
  %s2269 = scalar_lea.vmem %s14, 8
  %2270 = vst.msk [vmem:[%s2269] sm:$0x3f] %vm2263, %v2267
  // Predicated region
  $region58: #{layered_cnn_tree_forward.1} parent=0 // pred_check
    _
  $region59: #{layered_cnn_tree_forward.1} parent=0 // pred_check_branch
    %2272 = sbr.rel (0) target = $region61
  $region60: #{layered_cnn_tree_forward.1} parent=0 // pred_region
    _
  $region61: #{layered_cnn_tree_forward.1} parent=0 // pred_fallthru
    _
  // Predicated region
  $region62: #{layered_cnn_tree_forward.1} parent=0 // pred_check
    _
  $region63: #{layered_cnn_tree_forward.1} parent=0 // pred_check_branch
    %2274 = sbr.rel (0) target = $region65
  $region64: #{layered_cnn_tree_forward.1} parent=0 // pred_region
    _
  $region65: #{layered_cnn_tree_forward.1} parent=0 // pred_fallthru
    _

</llo_original>
